<compile_context>
chip_gen: v6e
topology: v6e:2x2x1
jax: 0.10.0
libtpu: 0.0.40
codegen_flags: <defaults>
</compile_context>

<pallas_src>
from functools import partial

import jax
import jax.numpy as jnp
from jax import lax
from jax.experimental import pallas as pl
from jax.experimental.pallas import tpu as pltpu


# ----------------------------------------------------------------------------
# Fused kernel (transposed layout): multi-hot embedding gather folded into the
# block-diagonal layer-1 matmul, layer-2 matmul, normalize, dot, sigmoid.
# ----------------------------------------------------------------------------
def _dssm_kernel(temperature, split_e,
                 idx_ref, w1t_ref, b1_ref, w2t_ref, b2_ref, out_ref):
    eps = 1e-12                       # F.normalize eps
    inv_temp = 1.0 / temperature
    cdt = w1t_ref.dtype
    nf, tb = idx_ref.shape
    vpad = w1t_ref.shape[1]

    # ---- fused embedding gather + layer 1 -----------------------------------
    # multi-hot M[v, b] = 1 iff some feature f of row b selects stacked-vocab
    # row v; layer-1 weights already hold table_f @ W1_slice_f, so
    # W1t @ M == pre-activation of BOTH towers in one MXU matmul.
    idx = idx_ref[...]                                            # [nf, TB] int32
    iota_v = lax.broadcasted_iota(jnp.int32, (vpad, tb), 0)
    m = jnp.zeros((vpad, tb), jnp.float32)
    for f in range(nf):                                           # nf small, static
        m = m + (iota_v == idx[f:f + 1, :]).astype(jnp.float32)
    m = m.astype(cdt)

    h = jnp.dot(w1t_ref[...], m, preferred_element_type=jnp.float32) + b1_ref[...]
    h = jnp.maximum(h, 0.0)                                       # [H1u+H1i, TB] f32

    # ---- fused layer 2 (block-diagonal) --------------------------------------
    h = jnp.dot(w2t_ref[...], h.astype(cdt),
                preferred_element_type=jnp.float32) + b2_ref[...]
    h = jnp.maximum(h, 0.0)                                       # [2E, TB] f32

    # tower split: sublane-aligned row slice (E % 8 == 0)
    u = h[:split_e, :]
    it = h[split_e:, :]

    # F.normalize(p=2, dim=1) folded into the score:
    #   y = (u.i) * 1/max(||u||,eps) * 1/max(||i||,eps) / T   (recips on EUP)
    inv_nu = pl.reciprocal(
        jnp.maximum(jnp.sqrt(jnp.sum(u * u, axis=0, keepdims=True)), eps),
        approx=True)
    inv_ni = pl.reciprocal(
        jnp.maximum(jnp.sqrt(jnp.sum(it * it, axis=0, keepdims=True)), eps),
        approx=True)
    y = jnp.sum(u * it, axis=0, keepdims=True) * (inv_nu * inv_ni * inv_temp)  # [1,TB]
    out_ref[...] = pl.reciprocal(1.0 + jnp.exp(-y), approx=False)[None]  # sigmoid


# ----------------------------------------------------------------------------
# Packing (one-time): fold embedding tables into block-diagonal tower weights.
# ----------------------------------------------------------------------------
def _round_up(n, m):
    return ((n + m - 1) // m) * m


def _block_diag(a, b):
    m, n = a.shape
    p, q = b.shape
    z = jnp.zeros((m + p, n + q), dtype=jnp.result_type(a, b))
    z = z.at[:m, :n].set(a)
    z = z.at[m:, n:].set(b)
    return z


def pack_dssm(params, embed_dim, compute_dtype=jnp.bfloat16):
    """Fold embedding tables into the (transposed) fused layer-1 weights."""
    u_tabs, i_tabs = params["user_tables"], params["item_tables"]
    uw1, uw2 = params["uw1"], params["uw2"]
    iw1, iw2 = params["iw1"], params["iw2"]
    H1u, H1i = uw1.shape[1], iw1.shape[1]
    E = uw2.shape[1]
    assert iw2.shape[1] == E, "tower output dims must match for the dot"
    assert E % 8 == 0, "tower output dim must be sublane (8) aligned"

    rows, offsets, off = [], [], 0
    for f, t in enumerate(u_tabs):          # user features -> columns [0:H1u)
        fused = t.astype(jnp.float32) @ uw1[f * embed_dim:(f + 1) * embed_dim, :]
        rows.append(jnp.concatenate(
            [fused, jnp.zeros((t.shape[0], H1i), jnp.float32)], axis=1))
        offsets.append(off)
        off += t.shape[0]
    for f, t in enumerate(i_tabs):          # item features -> columns [H1u:H1u+H1i)
        fused = t.astype(jnp.float32) @ iw1[f * embed_dim:(f + 1) * embed_dim, :]
        rows.append(jnp.concatenate(
            [jnp.zeros((t.shape[0], H1u), jnp.float32), fused], axis=1))
        offsets.append(off)
        off += t.shape[0]
    w1f = jnp.concatenate(rows, axis=0)                        # [V, H1u+H1i]
    v_pad = _round_up(w1f.shape[0], 8)
    w1f = jnp.pad(w1f, ((0, v_pad - w1f.shape[0]), (0, 0)))

    # TODO(synk): assumes the stacked tables (a few KiB here) fit in VMEM once
    # folded into W1; huge-vocab tables would need an HBM-side gather instead.
    b1 = jnp.concatenate([params["ub1"], params["ib1"]], axis=-1)
    b2 = jnp.concatenate([params["ub2"], params["ib2"]], axis=-1)
    return dict(
        w1t=w1f.T.astype(compute_dtype),                       # [H1, V_pad]
        b1=b1.reshape(-1, 1).astype(jnp.float32),              # [H1, 1]
        w2t=_block_diag(uw2, iw2).T.astype(compute_dtype),     # [2E, H1]
        b2=b2.reshape(-1, 1).astype(jnp.float32),              # [2E, 1]
        offsets=jnp.asarray(offsets, jnp.int32),
        E=int(E))


# ----------------------------------------------------------------------------
# Wrapper: index plumbing, batch tiling, VMEM budget, pallas_call.
# ----------------------------------------------------------------------------
def dssm_pallas(user_x, item_x, packed, temperature=1.0, block_b=2048):
    """user_x: [B, n_uf] int, item_x: [B, n_if] int -> [B] f32 sigmoid scores."""
    B = user_x.shape[0]
    E = packed["E"]
    w1t, b1, w2t, b2 = packed["w1t"], packed["b1"], packed["w2t"], packed["b2"]
    H1, V_pad = w1t.shape
    H2 = w2t.shape[0]

    # Global (stacked-vocab) indices, transposed so batch is the lane axis.
    # Only ~16 B/row of int32 wrapper traffic (old path: ~256 B/row f32
    # embedding tensor + concat / cast / pad passes).
    gidx = (jnp.concatenate([user_x, item_x], axis=1).astype(jnp.int32)
            + packed["offsets"][None, :]).T                    # [nf, B]
    nf = gidx.shape[0]

    # Batch tiling: big tiles amortize the ~0.35 us/step grid overhead; cap so
    # the grid keeps >=2 tiles when B allows it (both v7x TensorCores busy).
    TB = max(256, min(block_b, _round_up(pl.cdiv(B, 2), 256)))
    Bp = _round_up(B, TB)
    if Bp != B:
        gidx = jnp.pad(gidx, ((0, 0), (0, Bp - B)))            # pad rows -> index 0
    num_tiles = Bp // TB

    # Generation-aware VMEM budget (v7x: 64 MiB/core; v5e/v6e: 128 MiB).
    cdt_size = jnp.dtype(w1t.dtype).itemsize
    stream = 2 * (nf * TB * 4 + TB * 4)                        # dbl-buffered idx + out
    weights = 2 * ((w1t.size + w2t.size) * cdt_size + (b1.size + b2.size) * 4)
    interm = V_pad * TB * (4 + 4 + cdt_size)                   # iota + multihot (+cast)
    interm += H1 * TB * (4 + cdt_size) + 2 * H2 * TB * 4       # h1 (+cast), h2 + epilogue
    need = stream + weights + interm + (4 << 20)
    try:
        cap = int(pltpu.get_tpu_info().vmem_capacity_bytes)
    except Exception:
        cap = 64 << 20                                         # conservative (v7x)
    vmem_limit = int(min(max(need, 32 << 20), cap - (8 << 20)))

    # NOTE: re-profile before adding pipeline_mode=pl.Buffered(3) on the index
    # input; at these sizes the streamed index block is tiny.
    out = pl.pallas_call(
        partial(_dssm_kernel, float(temperature), int(E)),
        grid=(num_tiles,),
        in_specs=[
            pl.BlockSpec((nf, TB), lambda b: (0, b)),          # indices: batch-tiled
            pl.BlockSpec(w1t.shape, lambda b: (0, 0)),         # fused tables+W1: resident
            pl.BlockSpec(b1.shape, lambda b: (0, 0)),
            pl.BlockSpec(w2t.shape, lambda b: (0, 0)),
            pl.BlockSpec(b2.shape, lambda b: (0, 0)),
        ],
        out_specs=pl.BlockSpec((1, 1, TB), lambda b: (b, 0, 0)),  # lane-dense output
        out_shape=jax.ShapeDtypeStruct((num_tiles, 1, TB), jnp.float32),
        compiler_params=pltpu.CompilerParams(
            dimension_semantics=("parallel",),
            vmem_limit_bytes=vmem_limit),
    )(gidx, w1t, b1, w2t, b2)
    return out.reshape(-1)[:B]                                 # -> [B]


# ----------------------------------------------------------------------------
# Plain-JAX reference + deterministic parameter construction.
# ----------------------------------------------------------------------------
def embed_concat(tables, idx):
    return jnp.concatenate([t[idx[:, j]] for j, t in enumerate(tables)], axis=-1)


def init_params(key, user_vocabs, item_vocabs, embed_dim, user_dims_mlp, item_dims_mlp):
    keys = iter(jax.random.split(key, 32))

    def lin(kin, fan_in, fan_out):
        bound = 1.0 / jnp.sqrt(fan_in)
        kw, kb = jax.random.split(kin)
        w = jax.random.uniform(kw, (fan_in, fan_out), jnp.float32, -bound, bound)
        b = jax.random.uniform(kb, (1, fan_out), jnp.float32, -bound, bound)
        return w, b

    user_tables = [jax.random.normal(next(keys), (v, embed_dim), jnp.float32) * 0.1
                   for v in user_vocabs]
    item_tables = [jax.random.normal(next(keys), (v, embed_dim), jnp.float32) * 0.1
                   for v in item_vocabs]

    Du = embed_dim * len(user_vocabs)
    Di = embed_dim * len(item_vocabs)
    H1u, H2u = user_dims_mlp
    H1i, H2i = item_dims_mlp

    uw1, ub1 = lin(next(keys), Du, H1u)
    uw2, ub2 = lin(next(keys), H1u, H2u)
    iw1, ib1 = lin(next(keys), Di, H1i)
    iw2, ib2 = lin(next(keys), H1i, H2i)

    return dict(user_tables=user_tables, item_tables=item_tables,
                uw1=uw1, ub1=ub1, uw2=uw2, ub2=ub2,
                iw1=iw1, ib1=ib1, iw2=iw2, ib2=ib2)


def dssm_reference(user_x, item_x, p, temperature):
    """Pure-JAX f32 reference of the same forward pass (unfused towers)."""
    u_in = embed_concat(p["user_tables"], user_x)
    i_in = embed_concat(p["item_tables"], item_x)

    def tower(x, w1, b1, w2, b2):
        h = jnp.maximum(x @ w1 + b1, 0.0)
        h = jnp.maximum(h @ w2 + b2, 0.0)
        return h / jnp.maximum(jnp.linalg.norm(h, axis=-1, keepdims=True), 1e-12)

    u = tower(u_in, p["uw1"], p["ub1"], p["uw2"], p["ub2"])
    i = tower(i_in, p["iw1"], p["ib1"], p["iw2"], p["ib2"])
    return jax.nn.sigmoid(jnp.sum(u * i, axis=-1) / temperature)


if __name__ == "__main__":
    # 2 user + 2 item sparse features, embed_dim=16 -> 32-dim tower inputs,
    # MLP dims [64, 32] per tower, temperature = 1.0.
    embed_dim = 16
    user_vocabs = [50, 40]
    item_vocabs = [60, 30]
    temperature = 1.0

    key = jax.random.PRNGKey(0)
    kp, kd = jax.random.split(key)
    params = init_params(kp, user_vocabs, item_vocabs, embed_dim,
                         user_dims_mlp=(64, 32), item_dims_mlp=(64, 32))
    packed_f32 = pack_dssm(params, embed_dim, jnp.float32)
    packed_bf16 = pack_dssm(params, embed_dim, jnp.bfloat16)

    def run_case(B, case_key, packed, tol):
        ku, ki = jax.random.split(case_key)
        user_x = jax.random.randint(ku, (B, len(user_vocabs)), 0, min(user_vocabs))
        item_x = jax.random.randint(ki, (B, len(item_vocabs)), 0, min(item_vocabs))
        y = jax.block_until_ready(dssm_pallas(user_x, item_x, packed, temperature))
        y_ref = dssm_reference(user_x, item_x, params, temperature)
        assert y.shape == (B,)
        assert bool(jnp.all(jnp.isfinite(y)))
        assert jnp.allclose(y, y_ref, atol=tol, rtol=tol), (B, y[:8], y_ref[:8])

    keys = jax.random.split(kd, 3)
    # Tiny batch, f32 compute, single tile — tight-ish check (approx recips on norms).
    run_case(8, keys[0], packed_f32, 5e-3)
    # Medium batch, bf16: two 256-row tiles (>=2 tiles keeps both v7x cores busy) + padding.
    run_case(300, keys[1], packed_bf16, 3e-2)
    # Larger batch, bf16: raised (1280-row) tiles + padding, 2-tile grid.
    run_case(2500, keys[2], packed_bf16, 3e-2)

    print("KERNEL_OK")
</pallas_src>

<mosaic_0001>
module attributes {stable_mosaic.version = 11 : i64} {
  func.func @_dssm_kernel(%arg0: i32, %arg1: memref<4x256xi32, #tpu.memory_space<vmem>>, %arg2: memref<128x184xf32, #tpu.memory_space<vmem>>, %arg3: memref<128x1xf32, #tpu.memory_space<vmem>>, %arg4: memref<64x128xf32, #tpu.memory_space<vmem>>, %arg5: memref<64x1xf32, #tpu.memory_space<vmem>>, %arg6: memref<1x1x256xf32, #tpu.memory_space<vmem>>) attributes {dimension_semantics = [#tpu.dimension_semantics<parallel>], iteration_bounds = array<i64: 1>, scalar_prefetch = 0 : i64, scratch_operands = 0 : i64, tpu.core_type = #tpu.core_type<tc>, window_params = [{transform_indices = @transform_0, window_bounds = array<i64: 4, 256>}, {pipeline_mode = #tpu.pipeline_mode<synchronous>, transform_indices = @transform_1, window_bounds = array<i64: 128, 184>}, {pipeline_mode = #tpu.pipeline_mode<synchronous>, transform_indices = @transform_2, window_bounds = array<i64: 128, 1>}, {pipeline_mode = #tpu.pipeline_mode<synchronous>, transform_indices = @transform_3, window_bounds = array<i64: 64, 128>}, {pipeline_mode = #tpu.pipeline_mode<synchronous>, transform_indices = @transform_4, window_bounds = array<i64: 64, 1>}, {transform_indices = @transform_5, window_bounds = array<i64: 1, 1, 256>}]} {
    %c0 = arith.constant 0 : index
    %c0_0 = arith.constant 0 : index
    %0 = vector.load %arg1[%c0, %c0_0] : memref<4x256xi32, #tpu.memory_space<vmem>>, vector<4x256xi32>
    %1 = tpu.iota {dimensions = array<i32: 0>} : vector<184x256xi32>
    %cst = arith.constant 0.000000e+00 : f32
    %2 = vector.broadcast %cst : f32 to vector<184x256xf32>
    %3 = vector.extract_strided_slice %0 {offsets = [0, 0], sizes = [1, 256], strides = [1, 1]} : vector<4x256xi32> to vector<1x256xi32>
    %4 = vector.broadcast %3 : vector<1x256xi32> to vector<184x256xi32>
    %5 = arith.cmpi eq, %1, %4 : vector<184x256xi32>
    %6 = arith.extui %5 : vector<184x256xi1> to vector<184x256xi32>
    %7 = arith.sitofp %6 : vector<184x256xi32> to vector<184x256xf32>
    %8 = arith.addf %2, %7 : vector<184x256xf32>
    %9 = vector.extract_strided_slice %0 {offsets = [1, 0], sizes = [1, 256], strides = [1, 1]} : vector<4x256xi32> to vector<1x256xi32>
    %10 = vector.broadcast %9 : vector<1x256xi32> to vector<184x256xi32>
    %11 = arith.cmpi eq, %1, %10 : vector<184x256xi32>
    %12 = arith.extui %11 : vector<184x256xi1> to vector<184x256xi32>
    %13 = arith.sitofp %12 : vector<184x256xi32> to vector<184x256xf32>
    %14 = arith.addf %8, %13 : vector<184x256xf32>
    %15 = vector.extract_strided_slice %0 {offsets = [2, 0], sizes = [1, 256], strides = [1, 1]} : vector<4x256xi32> to vector<1x256xi32>
    %16 = vector.broadcast %15 : vector<1x256xi32> to vector<184x256xi32>
    %17 = arith.cmpi eq, %1, %16 : vector<184x256xi32>
    %18 = arith.extui %17 : vector<184x256xi1> to vector<184x256xi32>
    %19 = arith.sitofp %18 : vector<184x256xi32> to vector<184x256xf32>
    %20 = arith.addf %14, %19 : vector<184x256xf32>
    %21 = vector.extract_strided_slice %0 {offsets = [3, 0], sizes = [1, 256], strides = [1, 1]} : vector<4x256xi32> to vector<1x256xi32>
    %22 = vector.broadcast %21 : vector<1x256xi32> to vector<184x256xi32>
    %23 = arith.cmpi eq, %1, %22 : vector<184x256xi32>
    %24 = arith.extui %23 : vector<184x256xi1> to vector<184x256xi32>
    %25 = arith.sitofp %24 : vector<184x256xi32> to vector<184x256xf32>
    %26 = arith.addf %20, %25 : vector<184x256xf32>
    %c0_1 = arith.constant 0 : index
    %c0_2 = arith.constant 0 : index
    %27 = vector.load %arg2[%c0_1, %c0_2] : memref<128x184xf32, #tpu.memory_space<vmem>>, vector<128x184xf32>
    %cst_3 = arith.constant dense<0.000000e+00> : vector<128x256xf32>
    %28 = tpu.matmul %27, %26, %cst_3 {dimension_numbers = #tpu.dot_dimension_numbers<[1], [0], [0], [1], [0, 0, 1, 1], [], []>} : vector<128x184xf32>, vector<184x256xf32>, vector<128x256xf32> -> vector<128x256xf32>
    %c0_4 = arith.constant 0 : index
    %c0_5 = arith.constant 0 : index
    %29 = vector.load %arg3[%c0_4, %c0_5] : memref<128x1xf32, #tpu.memory_space<vmem>>, vector<128x1xf32>
    %30 = vector.broadcast %29 : vector<128x1xf32> to vector<128x256xf32>
    %31 = arith.addf %28, %30 : vector<128x256xf32>
    %cst_6 = arith.constant 0.000000e+00 : f32
    %32 = vector.broadcast %cst_6 : f32 to vector<128x256xf32>
    %33 = arith.maximumf %31, %32 : vector<128x256xf32>
    %c0_7 = arith.constant 0 : index
    %c0_8 = arith.constant 0 : index
    %34 = vector.load %arg4[%c0_7, %c0_8] : memref<64x128xf32, #tpu.memory_space<vmem>>, vector<64x128xf32>
    %cst_9 = arith.constant dense<0.000000e+00> : vector<64x256xf32>
    %35 = tpu.matmul %34, %33, %cst_9 {dimension_numbers = #tpu.dot_dimension_numbers<[1], [0], [0], [1], [0, 0, 1, 1], [], []>} : vector<64x128xf32>, vector<128x256xf32>, vector<64x256xf32> -> vector<64x256xf32>
    %c0_10 = arith.constant 0 : index
    %c0_11 = arith.constant 0 : index
    %36 = vector.load %arg5[%c0_10, %c0_11] : memref<64x1xf32, #tpu.memory_space<vmem>>, vector<64x1xf32>
    %37 = vector.broadcast %36 : vector<64x1xf32> to vector<64x256xf32>
    %38 = arith.addf %35, %37 : vector<64x256xf32>
    %cst_12 = arith.constant 0.000000e+00 : f32
    %39 = vector.broadcast %cst_12 : f32 to vector<64x256xf32>
    %40 = arith.maximumf %38, %39 : vector<64x256xf32>
    %41 = vector.extract_strided_slice %40 {offsets = [0, 0], sizes = [32, 256], strides = [1, 1]} : vector<64x256xf32> to vector<32x256xf32>
    %42 = vector.extract_strided_slice %40 {offsets = [32, 0], sizes = [32, 256], strides = [1, 1]} : vector<64x256xf32> to vector<32x256xf32>
    %43 = arith.mulf %41, %41 : vector<32x256xf32>
    %cst_13 = arith.constant dense<0.000000e+00> : vector<256xf32>
    %44 = vector.multi_reduction <add>, %43, %cst_13 [0] : vector<32x256xf32> to vector<256xf32>
    %45 = vector.shape_cast %44 : vector<256xf32> to vector<1x256xf32>
    %46 = math.sqrt %45 : vector<1x256xf32>
    %cst_14 = arith.constant 9.99999996E-13 : f32
    %47 = vector.broadcast %cst_14 : f32 to vector<1x256xf32>
    %48 = arith.maximumf %46, %47 : vector<1x256xf32>
    %49 = tpu.reciprocal %48 {approx = true} : vector<1x256xf32> -> vector<1x256xf32>
    %50 = arith.mulf %42, %42 : vector<32x256xf32>
    %cst_15 = arith.constant dense<0.000000e+00> : vector<256xf32>
    %51 = vector.multi_reduction <add>, %50, %cst_15 [0] : vector<32x256xf32> to vector<256xf32>
    %52 = vector.shape_cast %51 : vector<256xf32> to vector<1x256xf32>
    %53 = math.sqrt %52 : vector<1x256xf32>
    %cst_16 = arith.constant 9.99999996E-13 : f32
    %54 = vector.broadcast %cst_16 : f32 to vector<1x256xf32>
    %55 = arith.maximumf %53, %54 : vector<1x256xf32>
    %56 = tpu.reciprocal %55 {approx = true} : vector<1x256xf32> -> vector<1x256xf32>
    %57 = arith.mulf %41, %42 : vector<32x256xf32>
    %cst_17 = arith.constant dense<0.000000e+00> : vector<256xf32>
    %58 = vector.multi_reduction <add>, %57, %cst_17 [0] : vector<32x256xf32> to vector<256xf32>
    %59 = vector.shape_cast %58 : vector<256xf32> to vector<1x256xf32>
    %60 = arith.mulf %49, %56 : vector<1x256xf32>
    %cst_18 = arith.constant 1.000000e+00 : f32
    %61 = vector.broadcast %cst_18 : f32 to vector<1x256xf32>
    %62 = arith.mulf %60, %61 : vector<1x256xf32>
    %63 = arith.mulf %59, %62 : vector<1x256xf32>
    %cst_19 = arith.constant 0.000000e+00 : f32
    %64 = vector.broadcast %cst_19 : f32 to vector<1x256xf32>
    %65 = arith.subf %64, %63 : vector<1x256xf32>
    %66 = math.exp %65 : vector<1x256xf32>
    %cst_20 = arith.constant 1.000000e+00 : f32
    %67 = vector.broadcast %cst_20 : f32 to vector<1x256xf32>
    %68 = arith.addf %67, %66 : vector<1x256xf32>
    %69 = tpu.reciprocal %68 : vector<1x256xf32> -> vector<1x256xf32>
    %70 = vector.shape_cast %69 : vector<1x256xf32> to vector<1x1x256xf32>
    %c0_21 = arith.constant 0 : index
    %c0_22 = arith.constant 0 : index
    %c0_23 = arith.constant 0 : index
    %71 = vector.load %arg6[%c0_21, %c0_22, %c0_23] : memref<1x1x256xf32, #tpu.memory_space<vmem>>, vector<1x1x256xf32>
    tpu.vector_store %arg6[%c0_21, %c0_22, %c0_23], %70 {strides = array<i32>} : memref<1x1x256xf32, #tpu.memory_space<vmem>>, vector<1x1x256xf32>,
    return
  }
  func.func @transform_0(%arg0: i32) -> (i32, i32) {
    %c0_i32 = arith.constant 0 : i32
    %c0_i32_0 = arith.constant 0 : i32
    return %c0_i32, %arg0 : i32, i32
  }
  func.func @transform_1(%arg0: i32) -> (i32, i32) {
    %c0_i32 = arith.constant 0 : i32
    %c0_i32_0 = arith.constant 0 : i32
    %c0_i32_1 = arith.constant 0 : i32
    return %c0_i32, %c0_i32_0 : i32, i32
  }
  func.func @transform_2(%arg0: i32) -> (i32, i32) {
    %c0_i32 = arith.constant 0 : i32
    %c0_i32_0 = arith.constant 0 : i32
    %c0_i32_1 = arith.constant 0 : i32
    return %c0_i32, %c0_i32_0 : i32, i32
  }
  func.func @transform_3(%arg0: i32) -> (i32, i32) {
    %c0_i32 = arith.constant 0 : i32
    %c0_i32_0 = arith.constant 0 : i32
    %c0_i32_1 = arith.constant 0 : i32
    return %c0_i32, %c0_i32_0 : i32, i32
  }
  func.func @transform_4(%arg0: i32) -> (i32, i32) {
    %c0_i32 = arith.constant 0 : i32
    %c0_i32_0 = arith.constant 0 : i32
    %c0_i32_1 = arith.constant 0 : i32
    return %c0_i32, %c0_i32_0 : i32, i32
  }
  func.func @transform_5(%arg0: i32) -> (i32, i32, i32) {
    %c0_i32 = arith.constant 0 : i32
    %c0_i32_0 = arith.constant 0 : i32
    %c0_i32_1 = arith.constant 0 : i32
    return %arg0, %c0_i32, %c0_i32_0 : i32, i32, i32
  }
}

</mosaic_0001>

<llo_original>
// kernel: tpu_custom_call.1
$region0: #{tpu_custom_call.1}
  #allocation0 [shape = 'u32[]', space=smem, size = 0x4, offset = 0x4, fixed_abs, tag = 'smem constant byte address 0x4 - core index']
  #allocation1 [shape = 'u32[144,128]{1,0:T(1,128)}', space=vmem, size = 0x12000, scoped, tag = 'internal scratch']
  %s0 = inlined_call_operand.vmem [shape: s32[4,256], index: 0, kind: input, shape index: {}]
  %s1 = inlined_call_operand.vmem [shape: f32[128,184], index: 1, kind: input, shape index: {}]
  %s2 = inlined_call_operand.vmem [shape: f32[128,1], index: 2, kind: input, shape index: {}]
  %s3 = inlined_call_operand.vmem [shape: f32[64,128], index: 3, kind: input, shape index: {}]
  %s4 = inlined_call_operand.vmem [shape: f32[64,1], index: 4, kind: input, shape index: {}]
  %s5 = inlined_call_operand.hbm [shape: f32[1,1,256], index: 5, kind: output, shape index: {}]
  %s6 = sld [smem:[#allocation0]]
  $region30: #{tpu_custom_call.1} parent=0
    _
  %s8 = ssub.s32 1, %s6
  %s9 = scalar_select 0, %s8, %s6
  $region1: #{tpu_custom_call.1} parent=0
    #allocation2 [shape = 'u8[1024]{0}', space=vmem, size = 0x400, scoped, tag = 'output window, operand 0, single buffered']
    #allocation3 [shape = 's32[1]{0}', space=sflag, size = 0x4, scoped, tag = 'scoped memory for tpu_custom_call.1']
    %10 = vsyncpa [#allocation3], 0
    // Predicated region
    $region2: #{tpu_custom_call.1} parent=1 // pred_check
      _
    $region3: #{tpu_custom_call.1} parent=1 // pred_check_branch
      %12 = sbr.rel (0) target = $region5
    $region4: #{tpu_custom_call.1} parent=1 // pred_region
      _
    $region5: #{tpu_custom_call.1} parent=1 // pred_fallthru
      _
    // Predicated region
    $region6: #{tpu_custom_call.1} parent=1 // pred_check
      _
    $region7: #{tpu_custom_call.1} parent=1 // pred_check_branch
      %14 = sbr.rel (0) target = $region9
    $region8: #{tpu_custom_call.1} parent=1 // pred_region
      _
    $region9: #{tpu_custom_call.1} parent=1 // pred_fallthru
      _
    // Predicated region
    $region10: #{tpu_custom_call.1} parent=1 // pred_check
      _
    $region11: #{tpu_custom_call.1} parent=1 // pred_check_branch
      %16 = sbr.rel (0) target = $region13
    $region12: #{tpu_custom_call.1} parent=1 // pred_region
      _
    $region13: #{tpu_custom_call.1} parent=1 // pred_fallthru
      _
    // Predicated region
    $region14: #{tpu_custom_call.1} parent=1 // pred_check
      _
    $region15: #{tpu_custom_call.1} parent=1 // pred_check_branch
      %18 = sbr.rel (0) target = $region17
    $region16: #{tpu_custom_call.1} parent=1 // pred_region
      _
    $region17: #{tpu_custom_call.1} parent=1 // pred_fallthru
      _
    // Predicated region
    $region18: #{tpu_custom_call.1} parent=1 // pred_check
      _
    $region19: #{tpu_custom_call.1} parent=1 // pred_check_branch
      %20 = sbr.rel (0) target = $region21
    $region20: #{tpu_custom_call.1} parent=1 // pred_region
      _
    $region21: #{tpu_custom_call.1} parent=1 // pred_fallthru
      _
    %v21 = vld [vmem:[%s0] sm:$0xff]
    %v22 = vlaneseq
    %v23 = vshrl.u32 %v22, 7
    %v24 = vadd.s32 %v23, 8
    %v25 = vadd.s32 %v23, 16
    %v26 = vadd.s32 %v23, 24
    %v27 = vadd.s32 %v23, 32
    %v28 = vadd.s32 %v23, 40
    %v29 = vadd.s32 %v23, 48
    %v30 = vadd.s32 %v23, 56
    %v31 = vadd.s32 %v23, 64
    %v32 = vadd.s32 %v23, 72
    %v33 = vadd.s32 %v23, 80
    %v34 = vadd.s32 %v23, 88
    %v35 = vadd.s32 %v23, 96
    %v36 = vadd.s32 %v23, 104
    %v37 = vadd.s32 %v23, 112
    %v38 = vadd.s32 %v23, 120
    %v39 = vadd.s32 %v23, 128
    %v40 = vadd.s32 %v23, 136
    %v41 = vadd.s32 %v23, 144
    %v42 = vadd.s32 %v23, 152
    %v43 = vadd.s32 %v23, 160
    %v44 = vadd.s32 %v23, 168
    %v45 = vadd.s32 %v23, 176
    %v46 = vlaneseq
    %v47 = vshrl.u32 %v46, 7
    %v48 = vsub.s32 0, %v47
    %v49 = vrot.slane %v21, %v48
    %v50 = vlaneseq
    %v51 = vshrl.u32 %v50, 7
    %v52 = vsub.s32 4, %v51
    %v53 = vrot.slane %v21, %v52
    %v54 = vlaneseq
    %v55 = vshrl.u32 %v54, 7
    %v56 = vsub.s32 0, %v55
    %v57 = vrot.slane %v49, %v56
    %v58 = vlaneseq
    %v59 = vshrl.u32 %v58, 7
    %v60 = vsub.s32 0, %v59
    %v61 = vrot.slane %v53, %v60
    %vm62 = vcmp.eq.s32.totalorder %v23, %v57
    %vm63 = vcmp.eq.s32.totalorder %v23, %v61
    %vm64 = vcmp.eq.s32.totalorder %v24, %v57
    %vm65 = vcmp.eq.s32.totalorder %v24, %v61
    %vm66 = vcmp.eq.s32.totalorder %v25, %v57
    %vm67 = vcmp.eq.s32.totalorder %v25, %v61
    %vm68 = vcmp.eq.s32.totalorder %v26, %v57
    %vm69 = vcmp.eq.s32.totalorder %v26, %v61
    %vm70 = vcmp.eq.s32.totalorder %v27, %v57
    %vm71 = vcmp.eq.s32.totalorder %v27, %v61
    %vm72 = vcmp.eq.s32.totalorder %v28, %v57
    %vm73 = vcmp.eq.s32.totalorder %v28, %v61
    %vm74 = vcmp.eq.s32.totalorder %v29, %v57
    %vm75 = vcmp.eq.s32.totalorder %v29, %v61
    %vm76 = vcmp.eq.s32.totalorder %v30, %v57
    %vm77 = vcmp.eq.s32.totalorder %v30, %v61
    %vm78 = vcmp.eq.s32.totalorder %v31, %v57
    %vm79 = vcmp.eq.s32.totalorder %v31, %v61
    %vm80 = vcmp.eq.s32.totalorder %v32, %v57
    %vm81 = vcmp.eq.s32.totalorder %v32, %v61
    %vm82 = vcmp.eq.s32.totalorder %v33, %v57
    %vm83 = vcmp.eq.s32.totalorder %v33, %v61
    %vm84 = vcmp.eq.s32.totalorder %v34, %v57
    %vm85 = vcmp.eq.s32.totalorder %v34, %v61
    %vm86 = vcmp.eq.s32.totalorder %v35, %v57
    %vm87 = vcmp.eq.s32.totalorder %v35, %v61
    %vm88 = vcmp.eq.s32.totalorder %v36, %v57
    %vm89 = vcmp.eq.s32.totalorder %v36, %v61
    %vm90 = vcmp.eq.s32.totalorder %v37, %v57
    %vm91 = vcmp.eq.s32.totalorder %v37, %v61
    %vm92 = vcmp.eq.s32.totalorder %v38, %v57
    %vm93 = vcmp.eq.s32.totalorder %v38, %v61
    %vm94 = vcmp.eq.s32.totalorder %v39, %v57
    %vm95 = vcmp.eq.s32.totalorder %v39, %v61
    %vm96 = vcmp.eq.s32.totalorder %v40, %v57
    %vm97 = vcmp.eq.s32.totalorder %v40, %v61
    %vm98 = vcmp.eq.s32.totalorder %v41, %v57
    %vm99 = vcmp.eq.s32.totalorder %v41, %v61
    %vm100 = vcmp.eq.s32.totalorder %v42, %v57
    %vm101 = vcmp.eq.s32.totalorder %v42, %v61
    %vm102 = vcmp.eq.s32.totalorder %v43, %v57
    %vm103 = vcmp.eq.s32.totalorder %v43, %v61
    %vm104 = vcmp.eq.s32.totalorder %v44, %v57
    %vm105 = vcmp.eq.s32.totalorder %v44, %v61
    %vm106 = vcmp.eq.s32.totalorder %v45, %v57
    %vm107 = vcmp.eq.s32.totalorder %v45, %v61
    %v108 = vsel %vm62, 1, 0
    %v109 = vsel %vm63, 1, 0
    %v110 = vsel %vm64, 1, 0
    %v111 = vsel %vm65, 1, 0
    %v112 = vsel %vm66, 1, 0
    %v113 = vsel %vm67, 1, 0
    %v114 = vsel %vm68, 1, 0
    %v115 = vsel %vm69, 1, 0
    %v116 = vsel %vm70, 1, 0
    %v117 = vsel %vm71, 1, 0
    %v118 = vsel %vm72, 1, 0
    %v119 = vsel %vm73, 1, 0
    %v120 = vsel %vm74, 1, 0
    %v121 = vsel %vm75, 1, 0
    %v122 = vsel %vm76, 1, 0
    %v123 = vsel %vm77, 1, 0
    %v124 = vsel %vm78, 1, 0
    %v125 = vsel %vm79, 1, 0
    %v126 = vsel %vm80, 1, 0
    %v127 = vsel %vm81, 1, 0
    %v128 = vsel %vm82, 1, 0
    %v129 = vsel %vm83, 1, 0
    %v130 = vsel %vm84, 1, 0
    %v131 = vsel %vm85, 1, 0
    %v132 = vsel %vm86, 1, 0
    %v133 = vsel %vm87, 1, 0
    %v134 = vsel %vm88, 1, 0
    %v135 = vsel %vm89, 1, 0
    %v136 = vsel %vm90, 1, 0
    %v137 = vsel %vm91, 1, 0
    %v138 = vsel %vm92, 1, 0
    %v139 = vsel %vm93, 1, 0
    %v140 = vsel %vm94, 1, 0
    %v141 = vsel %vm95, 1, 0
    %v142 = vsel %vm96, 1, 0
    %v143 = vsel %vm97, 1, 0
    %v144 = vsel %vm98, 1, 0
    %v145 = vsel %vm99, 1, 0
    %v146 = vsel %vm100, 1, 0
    %v147 = vsel %vm101, 1, 0
    %v148 = vsel %vm102, 1, 0
    %v149 = vsel %vm103, 1, 0
    %v150 = vsel %vm104, 1, 0
    %v151 = vsel %vm105, 1, 0
    %v152 = vsel %vm106, 1, 0
    %v153 = vsel %vm107, 1, 0
    %v154 = vcvt.s32.f32 %v108
    %v155 = vcvt.s32.f32 %v109
    %v156 = vcvt.s32.f32 %v110
    %v157 = vcvt.s32.f32 %v111
    %v158 = vcvt.s32.f32 %v112
    %v159 = vcvt.s32.f32 %v113
    %v160 = vcvt.s32.f32 %v114
    %v161 = vcvt.s32.f32 %v115
    %v162 = vcvt.s32.f32 %v116
    %v163 = vcvt.s32.f32 %v117
    %v164 = vcvt.s32.f32 %v118
    %v165 = vcvt.s32.f32 %v119
    %v166 = vcvt.s32.f32 %v120
    %v167 = vcvt.s32.f32 %v121
    %v168 = vcvt.s32.f32 %v122
    %v169 = vcvt.s32.f32 %v123
    %v170 = vcvt.s32.f32 %v124
    %v171 = vcvt.s32.f32 %v125
    %v172 = vcvt.s32.f32 %v126
    %v173 = vcvt.s32.f32 %v127
    %v174 = vcvt.s32.f32 %v128
    %v175 = vcvt.s32.f32 %v129
    %v176 = vcvt.s32.f32 %v130
    %v177 = vcvt.s32.f32 %v131
    %v178 = vcvt.s32.f32 %v132
    %v179 = vcvt.s32.f32 %v133
    %v180 = vcvt.s32.f32 %v134
    %v181 = vcvt.s32.f32 %v135
    %v182 = vcvt.s32.f32 %v136
    %v183 = vcvt.s32.f32 %v137
    %v184 = vcvt.s32.f32 %v138
    %v185 = vcvt.s32.f32 %v139
    %v186 = vcvt.s32.f32 %v140
    %v187 = vcvt.s32.f32 %v141
    %v188 = vcvt.s32.f32 %v142
    %v189 = vcvt.s32.f32 %v143
    %v190 = vcvt.s32.f32 %v144
    %v191 = vcvt.s32.f32 %v145
    %v192 = vcvt.s32.f32 %v146
    %v193 = vcvt.s32.f32 %v147
    %v194 = vcvt.s32.f32 %v148
    %v195 = vcvt.s32.f32 %v149
    %v196 = vcvt.s32.f32 %v150
    %v197 = vcvt.s32.f32 %v151
    %v198 = vcvt.s32.f32 %v152
    %v199 = vcvt.s32.f32 %v153
    %v200 = vadd.f32 %v154, 0.0
    %v201 = vadd.f32 %v155, 0.0
    %v202 = vadd.f32 %v156, 0.0
    %v203 = vadd.f32 %v157, 0.0
    %v204 = vadd.f32 %v158, 0.0
    %v205 = vadd.f32 %v159, 0.0
    %v206 = vadd.f32 %v160, 0.0
    %v207 = vadd.f32 %v161, 0.0
    %v208 = vadd.f32 %v162, 0.0
    %v209 = vadd.f32 %v163, 0.0
    %v210 = vadd.f32 %v164, 0.0
    %v211 = vadd.f32 %v165, 0.0
    %v212 = vadd.f32 %v166, 0.0
    %v213 = vadd.f32 %v167, 0.0
    %v214 = vadd.f32 %v168, 0.0
    %v215 = vadd.f32 %v169, 0.0
    %v216 = vadd.f32 %v170, 0.0
    %v217 = vadd.f32 %v171, 0.0
    %v218 = vadd.f32 %v172, 0.0
    %v219 = vadd.f32 %v173, 0.0
    %v220 = vadd.f32 %v174, 0.0
    %v221 = vadd.f32 %v175, 0.0
    %v222 = vadd.f32 %v176, 0.0
    %v223 = vadd.f32 %v177, 0.0
    %v224 = vadd.f32 %v178, 0.0
    %v225 = vadd.f32 %v179, 0.0
    %v226 = vadd.f32 %v180, 0.0
    %v227 = vadd.f32 %v181, 0.0
    %v228 = vadd.f32 %v182, 0.0
    %v229 = vadd.f32 %v183, 0.0
    %v230 = vadd.f32 %v184, 0.0
    %v231 = vadd.f32 %v185, 0.0
    %v232 = vadd.f32 %v186, 0.0
    %v233 = vadd.f32 %v187, 0.0
    %v234 = vadd.f32 %v188, 0.0
    %v235 = vadd.f32 %v189, 0.0
    %v236 = vadd.f32 %v190, 0.0
    %v237 = vadd.f32 %v191, 0.0
    %v238 = vadd.f32 %v192, 0.0
    %v239 = vadd.f32 %v193, 0.0
    %v240 = vadd.f32 %v194, 0.0
    %v241 = vadd.f32 %v195, 0.0
    %v242 = vadd.f32 %v196, 0.0
    %v243 = vadd.f32 %v197, 0.0
    %v244 = vadd.f32 %v198, 0.0
    %v245 = vadd.f32 %v199, 0.0
    %v246 = vlaneseq
    %v247 = vshrl.u32 %v246, 7
    %v248 = vsub.s32 1, %v247
    %v249 = vrot.slane %v21, %v248
    %v250 = vlaneseq
    %v251 = vshrl.u32 %v250, 7
    %v252 = vsub.s32 5, %v251
    %v253 = vrot.slane %v21, %v252
    %v254 = vlaneseq
    %v255 = vshrl.u32 %v254, 7
    %v256 = vsub.s32 1, %v255
    %v257 = vrot.slane %v249, %v256
    %v258 = vlaneseq
    %v259 = vshrl.u32 %v258, 7
    %v260 = vsub.s32 1, %v259
    %v261 = vrot.slane %v253, %v260
    %vm262 = vcmp.eq.s32.totalorder %v23, %v257
    %vm263 = vcmp.eq.s32.totalorder %v23, %v261
    %vm264 = vcmp.eq.s32.totalorder %v24, %v257
    %vm265 = vcmp.eq.s32.totalorder %v24, %v261
    %vm266 = vcmp.eq.s32.totalorder %v25, %v257
    %vm267 = vcmp.eq.s32.totalorder %v25, %v261
    %vm268 = vcmp.eq.s32.totalorder %v26, %v257
    %vm269 = vcmp.eq.s32.totalorder %v26, %v261
    %vm270 = vcmp.eq.s32.totalorder %v27, %v257
    %vm271 = vcmp.eq.s32.totalorder %v27, %v261
    %vm272 = vcmp.eq.s32.totalorder %v28, %v257
    %vm273 = vcmp.eq.s32.totalorder %v28, %v261
    %vm274 = vcmp.eq.s32.totalorder %v29, %v257
    %vm275 = vcmp.eq.s32.totalorder %v29, %v261
    %vm276 = vcmp.eq.s32.totalorder %v30, %v257
    %vm277 = vcmp.eq.s32.totalorder %v30, %v261
    %vm278 = vcmp.eq.s32.totalorder %v31, %v257
    %vm279 = vcmp.eq.s32.totalorder %v31, %v261
    %vm280 = vcmp.eq.s32.totalorder %v32, %v257
    %vm281 = vcmp.eq.s32.totalorder %v32, %v261
    %vm282 = vcmp.eq.s32.totalorder %v33, %v257
    %vm283 = vcmp.eq.s32.totalorder %v33, %v261
    %vm284 = vcmp.eq.s32.totalorder %v34, %v257
    %vm285 = vcmp.eq.s32.totalorder %v34, %v261
    %vm286 = vcmp.eq.s32.totalorder %v35, %v257
    %vm287 = vcmp.eq.s32.totalorder %v35, %v261
    %vm288 = vcmp.eq.s32.totalorder %v36, %v257
    %vm289 = vcmp.eq.s32.totalorder %v36, %v261
    %vm290 = vcmp.eq.s32.totalorder %v37, %v257
    %vm291 = vcmp.eq.s32.totalorder %v37, %v261
    %vm292 = vcmp.eq.s32.totalorder %v38, %v257
    %vm293 = vcmp.eq.s32.totalorder %v38, %v261
    %vm294 = vcmp.eq.s32.totalorder %v39, %v257
    %vm295 = vcmp.eq.s32.totalorder %v39, %v261
    %vm296 = vcmp.eq.s32.totalorder %v40, %v257
    %vm297 = vcmp.eq.s32.totalorder %v40, %v261
    %vm298 = vcmp.eq.s32.totalorder %v41, %v257
    %vm299 = vcmp.eq.s32.totalorder %v41, %v261
    %vm300 = vcmp.eq.s32.totalorder %v42, %v257
    %vm301 = vcmp.eq.s32.totalorder %v42, %v261
    %vm302 = vcmp.eq.s32.totalorder %v43, %v257
    %vm303 = vcmp.eq.s32.totalorder %v43, %v261
    %vm304 = vcmp.eq.s32.totalorder %v44, %v257
    %vm305 = vcmp.eq.s32.totalorder %v44, %v261
    %vm306 = vcmp.eq.s32.totalorder %v45, %v257
    %vm307 = vcmp.eq.s32.totalorder %v45, %v261
    %v308 = vsel %vm262, 1, 0
    %v309 = vsel %vm263, 1, 0
    %v310 = vsel %vm264, 1, 0
    %v311 = vsel %vm265, 1, 0
    %v312 = vsel %vm266, 1, 0
    %v313 = vsel %vm267, 1, 0
    %v314 = vsel %vm268, 1, 0
    %v315 = vsel %vm269, 1, 0
    %v316 = vsel %vm270, 1, 0
    %v317 = vsel %vm271, 1, 0
    %v318 = vsel %vm272, 1, 0
    %v319 = vsel %vm273, 1, 0
    %v320 = vsel %vm274, 1, 0
    %v321 = vsel %vm275, 1, 0
    %v322 = vsel %vm276, 1, 0
    %v323 = vsel %vm277, 1, 0
    %v324 = vsel %vm278, 1, 0
    %v325 = vsel %vm279, 1, 0
    %v326 = vsel %vm280, 1, 0
    %v327 = vsel %vm281, 1, 0
    %v328 = vsel %vm282, 1, 0
    %v329 = vsel %vm283, 1, 0
    %v330 = vsel %vm284, 1, 0
    %v331 = vsel %vm285, 1, 0
    %v332 = vsel %vm286, 1, 0
    %v333 = vsel %vm287, 1, 0
    %v334 = vsel %vm288, 1, 0
    %v335 = vsel %vm289, 1, 0
    %v336 = vsel %vm290, 1, 0
    %v337 = vsel %vm291, 1, 0
    %v338 = vsel %vm292, 1, 0
    %v339 = vsel %vm293, 1, 0
    %v340 = vsel %vm294, 1, 0
    %v341 = vsel %vm295, 1, 0
    %v342 = vsel %vm296, 1, 0
    %v343 = vsel %vm297, 1, 0
    %v344 = vsel %vm298, 1, 0
    %v345 = vsel %vm299, 1, 0
    %v346 = vsel %vm300, 1, 0
    %v347 = vsel %vm301, 1, 0
    %v348 = vsel %vm302, 1, 0
    %v349 = vsel %vm303, 1, 0
    %v350 = vsel %vm304, 1, 0
    %v351 = vsel %vm305, 1, 0
    %v352 = vsel %vm306, 1, 0
    %v353 = vsel %vm307, 1, 0
    %v354 = vcvt.s32.f32 %v308
    %v355 = vcvt.s32.f32 %v309
    %v356 = vcvt.s32.f32 %v310
    %v357 = vcvt.s32.f32 %v311
    %v358 = vcvt.s32.f32 %v312
    %v359 = vcvt.s32.f32 %v313
    %v360 = vcvt.s32.f32 %v314
    %v361 = vcvt.s32.f32 %v315
    %v362 = vcvt.s32.f32 %v316
    %v363 = vcvt.s32.f32 %v317
    %v364 = vcvt.s32.f32 %v318
    %v365 = vcvt.s32.f32 %v319
    %v366 = vcvt.s32.f32 %v320
    %v367 = vcvt.s32.f32 %v321
    %v368 = vcvt.s32.f32 %v322
    %v369 = vcvt.s32.f32 %v323
    %v370 = vcvt.s32.f32 %v324
    %v371 = vcvt.s32.f32 %v325
    %v372 = vcvt.s32.f32 %v326
    %v373 = vcvt.s32.f32 %v327
    %v374 = vcvt.s32.f32 %v328
    %v375 = vcvt.s32.f32 %v329
    %v376 = vcvt.s32.f32 %v330
    %v377 = vcvt.s32.f32 %v331
    %v378 = vcvt.s32.f32 %v332
    %v379 = vcvt.s32.f32 %v333
    %v380 = vcvt.s32.f32 %v334
    %v381 = vcvt.s32.f32 %v335
    %v382 = vcvt.s32.f32 %v336
    %v383 = vcvt.s32.f32 %v337
    %v384 = vcvt.s32.f32 %v338
    %v385 = vcvt.s32.f32 %v339
    %v386 = vcvt.s32.f32 %v340
    %v387 = vcvt.s32.f32 %v341
    %v388 = vcvt.s32.f32 %v342
    %v389 = vcvt.s32.f32 %v343
    %v390 = vcvt.s32.f32 %v344
    %v391 = vcvt.s32.f32 %v345
    %v392 = vcvt.s32.f32 %v346
    %v393 = vcvt.s32.f32 %v347
    %v394 = vcvt.s32.f32 %v348
    %v395 = vcvt.s32.f32 %v349
    %v396 = vcvt.s32.f32 %v350
    %v397 = vcvt.s32.f32 %v351
    %v398 = vcvt.s32.f32 %v352
    %v399 = vcvt.s32.f32 %v353
    %v400 = vadd.f32 %v200, %v354
    %v401 = vadd.f32 %v201, %v355
    %v402 = vadd.f32 %v202, %v356
    %v403 = vadd.f32 %v203, %v357
    %v404 = vadd.f32 %v204, %v358
    %v405 = vadd.f32 %v205, %v359
    %v406 = vadd.f32 %v206, %v360
    %v407 = vadd.f32 %v207, %v361
    %v408 = vadd.f32 %v208, %v362
    %v409 = vadd.f32 %v209, %v363
    %v410 = vadd.f32 %v210, %v364
    %v411 = vadd.f32 %v211, %v365
    %v412 = vadd.f32 %v212, %v366
    %v413 = vadd.f32 %v213, %v367
    %v414 = vadd.f32 %v214, %v368
    %v415 = vadd.f32 %v215, %v369
    %v416 = vadd.f32 %v216, %v370
    %v417 = vadd.f32 %v217, %v371
    %v418 = vadd.f32 %v218, %v372
    %v419 = vadd.f32 %v219, %v373
    %v420 = vadd.f32 %v220, %v374
    %v421 = vadd.f32 %v221, %v375
    %v422 = vadd.f32 %v222, %v376
    %v423 = vadd.f32 %v223, %v377
    %v424 = vadd.f32 %v224, %v378
    %v425 = vadd.f32 %v225, %v379
    %v426 = vadd.f32 %v226, %v380
    %v427 = vadd.f32 %v227, %v381
    %v428 = vadd.f32 %v228, %v382
    %v429 = vadd.f32 %v229, %v383
    %v430 = vadd.f32 %v230, %v384
    %v431 = vadd.f32 %v231, %v385
    %v432 = vadd.f32 %v232, %v386
    %v433 = vadd.f32 %v233, %v387
    %v434 = vadd.f32 %v234, %v388
    %v435 = vadd.f32 %v235, %v389
    %v436 = vadd.f32 %v236, %v390
    %v437 = vadd.f32 %v237, %v391
    %v438 = vadd.f32 %v238, %v392
    %v439 = vadd.f32 %v239, %v393
    %v440 = vadd.f32 %v240, %v394
    %v441 = vadd.f32 %v241, %v395
    %v442 = vadd.f32 %v242, %v396
    %v443 = vadd.f32 %v243, %v397
    %v444 = vadd.f32 %v244, %v398
    %v445 = vadd.f32 %v245, %v399
    %v446 = vlaneseq
    %v447 = vshrl.u32 %v446, 7
    %v448 = vsub.s32 2, %v447
    %v449 = vrot.slane %v21, %v448
    %v450 = vlaneseq
    %v451 = vshrl.u32 %v450, 7
    %v452 = vsub.s32 6, %v451
    %v453 = vrot.slane %v21, %v452
    %v454 = vlaneseq
    %v455 = vshrl.u32 %v454, 7
    %v456 = vsub.s32 2, %v455
    %v457 = vrot.slane %v449, %v456
    %v458 = vlaneseq
    %v459 = vshrl.u32 %v458, 7
    %v460 = vsub.s32 2, %v459
    %v461 = vrot.slane %v453, %v460
    %vm462 = vcmp.eq.s32.totalorder %v23, %v457
    %vm463 = vcmp.eq.s32.totalorder %v23, %v461
    %vm464 = vcmp.eq.s32.totalorder %v24, %v457
    %vm465 = vcmp.eq.s32.totalorder %v24, %v461
    %vm466 = vcmp.eq.s32.totalorder %v25, %v457
    %vm467 = vcmp.eq.s32.totalorder %v25, %v461
    %vm468 = vcmp.eq.s32.totalorder %v26, %v457
    %vm469 = vcmp.eq.s32.totalorder %v26, %v461
    %vm470 = vcmp.eq.s32.totalorder %v27, %v457
    %vm471 = vcmp.eq.s32.totalorder %v27, %v461
    %vm472 = vcmp.eq.s32.totalorder %v28, %v457
    %vm473 = vcmp.eq.s32.totalorder %v28, %v461
    %vm474 = vcmp.eq.s32.totalorder %v29, %v457
    %vm475 = vcmp.eq.s32.totalorder %v29, %v461
    %vm476 = vcmp.eq.s32.totalorder %v30, %v457
    %vm477 = vcmp.eq.s32.totalorder %v30, %v461
    %vm478 = vcmp.eq.s32.totalorder %v31, %v457
    %vm479 = vcmp.eq.s32.totalorder %v31, %v461
    %vm480 = vcmp.eq.s32.totalorder %v32, %v457
    %vm481 = vcmp.eq.s32.totalorder %v32, %v461
    %vm482 = vcmp.eq.s32.totalorder %v33, %v457
    %vm483 = vcmp.eq.s32.totalorder %v33, %v461
    %vm484 = vcmp.eq.s32.totalorder %v34, %v457
    %vm485 = vcmp.eq.s32.totalorder %v34, %v461
    %vm486 = vcmp.eq.s32.totalorder %v35, %v457
    %vm487 = vcmp.eq.s32.totalorder %v35, %v461
    %vm488 = vcmp.eq.s32.totalorder %v36, %v457
    %vm489 = vcmp.eq.s32.totalorder %v36, %v461
    %vm490 = vcmp.eq.s32.totalorder %v37, %v457
    %vm491 = vcmp.eq.s32.totalorder %v37, %v461
    %vm492 = vcmp.eq.s32.totalorder %v38, %v457
    %vm493 = vcmp.eq.s32.totalorder %v38, %v461
    %vm494 = vcmp.eq.s32.totalorder %v39, %v457
    %vm495 = vcmp.eq.s32.totalorder %v39, %v461
    %vm496 = vcmp.eq.s32.totalorder %v40, %v457
    %vm497 = vcmp.eq.s32.totalorder %v40, %v461
    %vm498 = vcmp.eq.s32.totalorder %v41, %v457
    %vm499 = vcmp.eq.s32.totalorder %v41, %v461
    %vm500 = vcmp.eq.s32.totalorder %v42, %v457
    %vm501 = vcmp.eq.s32.totalorder %v42, %v461
    %vm502 = vcmp.eq.s32.totalorder %v43, %v457
    %vm503 = vcmp.eq.s32.totalorder %v43, %v461
    %vm504 = vcmp.eq.s32.totalorder %v44, %v457
    %vm505 = vcmp.eq.s32.totalorder %v44, %v461
    %vm506 = vcmp.eq.s32.totalorder %v45, %v457
    %vm507 = vcmp.eq.s32.totalorder %v45, %v461
    %v508 = vsel %vm462, 1, 0
    %v509 = vsel %vm463, 1, 0
    %v510 = vsel %vm464, 1, 0
    %v511 = vsel %vm465, 1, 0
    %v512 = vsel %vm466, 1, 0
    %v513 = vsel %vm467, 1, 0
    %v514 = vsel %vm468, 1, 0
    %v515 = vsel %vm469, 1, 0
    %v516 = vsel %vm470, 1, 0
    %v517 = vsel %vm471, 1, 0
    %v518 = vsel %vm472, 1, 0
    %v519 = vsel %vm473, 1, 0
    %v520 = vsel %vm474, 1, 0
    %v521 = vsel %vm475, 1, 0
    %v522 = vsel %vm476, 1, 0
    %v523 = vsel %vm477, 1, 0
    %v524 = vsel %vm478, 1, 0
    %v525 = vsel %vm479, 1, 0
    %v526 = vsel %vm480, 1, 0
    %v527 = vsel %vm481, 1, 0
    %v528 = vsel %vm482, 1, 0
    %v529 = vsel %vm483, 1, 0
    %v530 = vsel %vm484, 1, 0
    %v531 = vsel %vm485, 1, 0
    %v532 = vsel %vm486, 1, 0
    %v533 = vsel %vm487, 1, 0
    %v534 = vsel %vm488, 1, 0
    %v535 = vsel %vm489, 1, 0
    %v536 = vsel %vm490, 1, 0
    %v537 = vsel %vm491, 1, 0
    %v538 = vsel %vm492, 1, 0
    %v539 = vsel %vm493, 1, 0
    %v540 = vsel %vm494, 1, 0
    %v541 = vsel %vm495, 1, 0
    %v542 = vsel %vm496, 1, 0
    %v543 = vsel %vm497, 1, 0
    %v544 = vsel %vm498, 1, 0
    %v545 = vsel %vm499, 1, 0
    %v546 = vsel %vm500, 1, 0
    %v547 = vsel %vm501, 1, 0
    %v548 = vsel %vm502, 1, 0
    %v549 = vsel %vm503, 1, 0
    %v550 = vsel %vm504, 1, 0
    %v551 = vsel %vm505, 1, 0
    %v552 = vsel %vm506, 1, 0
    %v553 = vsel %vm507, 1, 0
    %v554 = vcvt.s32.f32 %v508
    %v555 = vcvt.s32.f32 %v509
    %v556 = vcvt.s32.f32 %v510
    %v557 = vcvt.s32.f32 %v511
    %v558 = vcvt.s32.f32 %v512
    %v559 = vcvt.s32.f32 %v513
    %v560 = vcvt.s32.f32 %v514
    %v561 = vcvt.s32.f32 %v515
    %v562 = vcvt.s32.f32 %v516
    %v563 = vcvt.s32.f32 %v517
    %v564 = vcvt.s32.f32 %v518
    %v565 = vcvt.s32.f32 %v519
    %v566 = vcvt.s32.f32 %v520
    %v567 = vcvt.s32.f32 %v521
    %v568 = vcvt.s32.f32 %v522
    %v569 = vcvt.s32.f32 %v523
    %v570 = vcvt.s32.f32 %v524
    %v571 = vcvt.s32.f32 %v525
    %v572 = vcvt.s32.f32 %v526
    %v573 = vcvt.s32.f32 %v527
    %v574 = vcvt.s32.f32 %v528
    %v575 = vcvt.s32.f32 %v529
    %v576 = vcvt.s32.f32 %v530
    %v577 = vcvt.s32.f32 %v531
    %v578 = vcvt.s32.f32 %v532
    %v579 = vcvt.s32.f32 %v533
    %v580 = vcvt.s32.f32 %v534
    %v581 = vcvt.s32.f32 %v535
    %v582 = vcvt.s32.f32 %v536
    %v583 = vcvt.s32.f32 %v537
    %v584 = vcvt.s32.f32 %v538
    %v585 = vcvt.s32.f32 %v539
    %v586 = vcvt.s32.f32 %v540
    %v587 = vcvt.s32.f32 %v541
    %v588 = vcvt.s32.f32 %v542
    %v589 = vcvt.s32.f32 %v543
    %v590 = vcvt.s32.f32 %v544
    %v591 = vcvt.s32.f32 %v545
    %v592 = vcvt.s32.f32 %v546
    %v593 = vcvt.s32.f32 %v547
    %v594 = vcvt.s32.f32 %v548
    %v595 = vcvt.s32.f32 %v549
    %v596 = vcvt.s32.f32 %v550
    %v597 = vcvt.s32.f32 %v551
    %v598 = vcvt.s32.f32 %v552
    %v599 = vcvt.s32.f32 %v553
    %v600 = vadd.f32 %v400, %v554
    %v601 = vadd.f32 %v401, %v555
    %v602 = vadd.f32 %v402, %v556
    %v603 = vadd.f32 %v403, %v557
    %v604 = vadd.f32 %v404, %v558
    %v605 = vadd.f32 %v405, %v559
    %v606 = vadd.f32 %v406, %v560
    %v607 = vadd.f32 %v407, %v561
    %v608 = vadd.f32 %v408, %v562
    %v609 = vadd.f32 %v409, %v563
    %v610 = vadd.f32 %v410, %v564
    %v611 = vadd.f32 %v411, %v565
    %v612 = vadd.f32 %v412, %v566
    %v613 = vadd.f32 %v413, %v567
    %v614 = vadd.f32 %v414, %v568
    %v615 = vadd.f32 %v415, %v569
    %v616 = vadd.f32 %v416, %v570
    %v617 = vadd.f32 %v417, %v571
    %v618 = vadd.f32 %v418, %v572
    %v619 = vadd.f32 %v419, %v573
    %v620 = vadd.f32 %v420, %v574
    %v621 = vadd.f32 %v421, %v575
    %v622 = vadd.f32 %v422, %v576
    %v623 = vadd.f32 %v423, %v577
    %v624 = vadd.f32 %v424, %v578
    %v625 = vadd.f32 %v425, %v579
    %v626 = vadd.f32 %v426, %v580
    %v627 = vadd.f32 %v427, %v581
    %v628 = vadd.f32 %v428, %v582
    %v629 = vadd.f32 %v429, %v583
    %v630 = vadd.f32 %v430, %v584
    %v631 = vadd.f32 %v431, %v585
    %v632 = vadd.f32 %v432, %v586
    %v633 = vadd.f32 %v433, %v587
    %v634 = vadd.f32 %v434, %v588
    %v635 = vadd.f32 %v435, %v589
    %v636 = vadd.f32 %v436, %v590
    %v637 = vadd.f32 %v437, %v591
    %v638 = vadd.f32 %v438, %v592
    %v639 = vadd.f32 %v439, %v593
    %v640 = vadd.f32 %v440, %v594
    %v641 = vadd.f32 %v441, %v595
    %v642 = vadd.f32 %v442, %v596
    %v643 = vadd.f32 %v443, %v597
    %v644 = vadd.f32 %v444, %v598
    %v645 = vadd.f32 %v445, %v599
    %v646 = vlaneseq
    %v647 = vshrl.u32 %v646, 7
    %v648 = vsub.s32 3, %v647
    %v649 = vrot.slane %v21, %v648
    %v650 = vlaneseq
    %v651 = vshrl.u32 %v650, 7
    %v652 = vsub.s32 7, %v651
    %v653 = vrot.slane %v21, %v652
    %v654 = vlaneseq
    %v655 = vshrl.u32 %v654, 7
    %v656 = vsub.s32 3, %v655
    %v657 = vrot.slane %v649, %v656
    %v658 = vlaneseq
    %v659 = vshrl.u32 %v658, 7
    %v660 = vsub.s32 3, %v659
    %v661 = vrot.slane %v653, %v660
    %vm662 = vcmp.eq.s32.totalorder %v23, %v657
    %vm663 = vcmp.eq.s32.totalorder %v23, %v661
    %vm664 = vcmp.eq.s32.totalorder %v24, %v657
    %vm665 = vcmp.eq.s32.totalorder %v24, %v661
    %vm666 = vcmp.eq.s32.totalorder %v25, %v657
    %vm667 = vcmp.eq.s32.totalorder %v25, %v661
    %vm668 = vcmp.eq.s32.totalorder %v26, %v657
    %vm669 = vcmp.eq.s32.totalorder %v26, %v661
    %vm670 = vcmp.eq.s32.totalorder %v27, %v657
    %vm671 = vcmp.eq.s32.totalorder %v27, %v661
    %vm672 = vcmp.eq.s32.totalorder %v28, %v657
    %vm673 = vcmp.eq.s32.totalorder %v28, %v661
    %vm674 = vcmp.eq.s32.totalorder %v29, %v657
    %vm675 = vcmp.eq.s32.totalorder %v29, %v661
    %vm676 = vcmp.eq.s32.totalorder %v30, %v657
    %vm677 = vcmp.eq.s32.totalorder %v30, %v661
    %vm678 = vcmp.eq.s32.totalorder %v31, %v657
    %vm679 = vcmp.eq.s32.totalorder %v31, %v661
    %vm680 = vcmp.eq.s32.totalorder %v32, %v657
    %vm681 = vcmp.eq.s32.totalorder %v32, %v661
    %vm682 = vcmp.eq.s32.totalorder %v33, %v657
    %vm683 = vcmp.eq.s32.totalorder %v33, %v661
    %vm684 = vcmp.eq.s32.totalorder %v34, %v657
    %vm685 = vcmp.eq.s32.totalorder %v34, %v661
    %vm686 = vcmp.eq.s32.totalorder %v35, %v657
    %vm687 = vcmp.eq.s32.totalorder %v35, %v661
    %vm688 = vcmp.eq.s32.totalorder %v36, %v657
    %vm689 = vcmp.eq.s32.totalorder %v36, %v661
    %vm690 = vcmp.eq.s32.totalorder %v37, %v657
    %vm691 = vcmp.eq.s32.totalorder %v37, %v661
    %vm692 = vcmp.eq.s32.totalorder %v38, %v657
    %vm693 = vcmp.eq.s32.totalorder %v38, %v661
    %vm694 = vcmp.eq.s32.totalorder %v39, %v657
    %vm695 = vcmp.eq.s32.totalorder %v39, %v661
    %vm696 = vcmp.eq.s32.totalorder %v40, %v657
    %vm697 = vcmp.eq.s32.totalorder %v40, %v661
    %vm698 = vcmp.eq.s32.totalorder %v41, %v657
    %vm699 = vcmp.eq.s32.totalorder %v41, %v661
    %vm700 = vcmp.eq.s32.totalorder %v42, %v657
    %vm701 = vcmp.eq.s32.totalorder %v42, %v661
    %vm702 = vcmp.eq.s32.totalorder %v43, %v657
    %vm703 = vcmp.eq.s32.totalorder %v43, %v661
    %vm704 = vcmp.eq.s32.totalorder %v44, %v657
    %vm705 = vcmp.eq.s32.totalorder %v44, %v661
    %vm706 = vcmp.eq.s32.totalorder %v45, %v657
    %vm707 = vcmp.eq.s32.totalorder %v45, %v661
    %v708 = vsel %vm662, 1, 0
    %v709 = vsel %vm663, 1, 0
    %v710 = vsel %vm664, 1, 0
    %v711 = vsel %vm665, 1, 0
    %v712 = vsel %vm666, 1, 0
    %v713 = vsel %vm667, 1, 0
    %v714 = vsel %vm668, 1, 0
    %v715 = vsel %vm669, 1, 0
    %v716 = vsel %vm670, 1, 0
    %v717 = vsel %vm671, 1, 0
    %v718 = vsel %vm672, 1, 0
    %v719 = vsel %vm673, 1, 0
    %v720 = vsel %vm674, 1, 0
    %v721 = vsel %vm675, 1, 0
    %v722 = vsel %vm676, 1, 0
    %v723 = vsel %vm677, 1, 0
    %v724 = vsel %vm678, 1, 0
    %v725 = vsel %vm679, 1, 0
    %v726 = vsel %vm680, 1, 0
    %v727 = vsel %vm681, 1, 0
    %v728 = vsel %vm682, 1, 0
    %v729 = vsel %vm683, 1, 0
    %v730 = vsel %vm684, 1, 0
    %v731 = vsel %vm685, 1, 0
    %v732 = vsel %vm686, 1, 0
    %v733 = vsel %vm687, 1, 0
    %v734 = vsel %vm688, 1, 0
    %v735 = vsel %vm689, 1, 0
    %v736 = vsel %vm690, 1, 0
    %v737 = vsel %vm691, 1, 0
    %v738 = vsel %vm692, 1, 0
    %v739 = vsel %vm693, 1, 0
    %v740 = vsel %vm694, 1, 0
    %v741 = vsel %vm695, 1, 0
    %v742 = vsel %vm696, 1, 0
    %v743 = vsel %vm697, 1, 0
    %v744 = vsel %vm698, 1, 0
    %v745 = vsel %vm699, 1, 0
    %v746 = vsel %vm700, 1, 0
    %v747 = vsel %vm701, 1, 0
    %v748 = vsel %vm702, 1, 0
    %v749 = vsel %vm703, 1, 0
    %v750 = vsel %vm704, 1, 0
    %v751 = vsel %vm705, 1, 0
    %v752 = vsel %vm706, 1, 0
    %v753 = vsel %vm707, 1, 0
    %v754 = vcvt.s32.f32 %v708
    %v755 = vcvt.s32.f32 %v709
    %v756 = vcvt.s32.f32 %v710
    %v757 = vcvt.s32.f32 %v711
    %v758 = vcvt.s32.f32 %v712
    %v759 = vcvt.s32.f32 %v713
    %v760 = vcvt.s32.f32 %v714
    %v761 = vcvt.s32.f32 %v715
    %v762 = vcvt.s32.f32 %v716
    %v763 = vcvt.s32.f32 %v717
    %v764 = vcvt.s32.f32 %v718
    %v765 = vcvt.s32.f32 %v719
    %v766 = vcvt.s32.f32 %v720
    %v767 = vcvt.s32.f32 %v721
    %v768 = vcvt.s32.f32 %v722
    %v769 = vcvt.s32.f32 %v723
    %v770 = vcvt.s32.f32 %v724
    %v771 = vcvt.s32.f32 %v725
    %v772 = vcvt.s32.f32 %v726
    %v773 = vcvt.s32.f32 %v727
    %v774 = vcvt.s32.f32 %v728
    %v775 = vcvt.s32.f32 %v729
    %v776 = vcvt.s32.f32 %v730
    %v777 = vcvt.s32.f32 %v731
    %v778 = vcvt.s32.f32 %v732
    %v779 = vcvt.s32.f32 %v733
    %v780 = vcvt.s32.f32 %v734
    %v781 = vcvt.s32.f32 %v735
    %v782 = vcvt.s32.f32 %v736
    %v783 = vcvt.s32.f32 %v737
    %v784 = vcvt.s32.f32 %v738
    %v785 = vcvt.s32.f32 %v739
    %v786 = vcvt.s32.f32 %v740
    %v787 = vcvt.s32.f32 %v741
    %v788 = vcvt.s32.f32 %v742
    %v789 = vcvt.s32.f32 %v743
    %v790 = vcvt.s32.f32 %v744
    %v791 = vcvt.s32.f32 %v745
    %v792 = vcvt.s32.f32 %v746
    %v793 = vcvt.s32.f32 %v747
    %v794 = vcvt.s32.f32 %v748
    %v795 = vcvt.s32.f32 %v749
    %v796 = vcvt.s32.f32 %v750
    %v797 = vcvt.s32.f32 %v751
    %v798 = vcvt.s32.f32 %v752
    %v799 = vcvt.s32.f32 %v753
    %v800 = vadd.f32 %v600, %v754
    %v801 = vadd.f32 %v601, %v755
    %v802 = vadd.f32 %v602, %v756
    %v803 = vadd.f32 %v603, %v757
    %v804 = vadd.f32 %v604, %v758
    %v805 = vadd.f32 %v605, %v759
    %v806 = vadd.f32 %v606, %v760
    %v807 = vadd.f32 %v607, %v761
    %v808 = vadd.f32 %v608, %v762
    %v809 = vadd.f32 %v609, %v763
    %v810 = vadd.f32 %v610, %v764
    %v811 = vadd.f32 %v611, %v765
    %v812 = vadd.f32 %v612, %v766
    %v813 = vadd.f32 %v613, %v767
    %v814 = vadd.f32 %v614, %v768
    %v815 = vadd.f32 %v615, %v769
    %v816 = vadd.f32 %v616, %v770
    %v817 = vadd.f32 %v617, %v771
    %v818 = vadd.f32 %v618, %v772
    %v819 = vadd.f32 %v619, %v773
    %v820 = vadd.f32 %v620, %v774
    %v821 = vadd.f32 %v621, %v775
    %v822 = vadd.f32 %v622, %v776
    %v823 = vadd.f32 %v623, %v777
    %v824 = vadd.f32 %v624, %v778
    %v825 = vadd.f32 %v625, %v779
    %v826 = vadd.f32 %v626, %v780
    %v827 = vadd.f32 %v627, %v781
    %v828 = vadd.f32 %v628, %v782
    %v829 = vadd.f32 %v629, %v783
    %v830 = vadd.f32 %v630, %v784
    %v831 = vadd.f32 %v631, %v785
    %v832 = vadd.f32 %v632, %v786
    %v833 = vadd.f32 %v633, %v787
    %v834 = vadd.f32 %v634, %v788
    %v835 = vadd.f32 %v635, %v789
    %v836 = vadd.f32 %v636, %v790
    %v837 = vadd.f32 %v637, %v791
    %v838 = vadd.f32 %v638, %v792
    %v839 = vadd.f32 %v639, %v793
    %v840 = vadd.f32 %v640, %v794
    %v841 = vadd.f32 %v641, %v795
    %v842 = vadd.f32 %v642, %v796
    %v843 = vadd.f32 %v643, %v797
    %v844 = vadd.f32 %v644, %v798
    %v845 = vadd.f32 %v645, %v799
    %v846 = vld [vmem:[%s1] sm:$0xff]
    %v847 = vld [vmem:[%s1 + $0x8] sm:$0xff]
    %v848 = vld [vmem:[%s1 + $0x10] sm:$0xff]
    %v849 = vld [vmem:[%s1 + $0x18] sm:$0xff]
    %v850 = vld [vmem:[%s1 + $0x20] sm:$0xff]
    %v851 = vld [vmem:[%s1 + $0x28] sm:$0xff]
    %v852 = vld [vmem:[%s1 + $0x30] sm:$0xff]
    %v853 = vld [vmem:[%s1 + $0x38] sm:$0xff]
    %v854 = vld [vmem:[%s1 + $0x40] sm:$0xff]
    %v855 = vld [vmem:[%s1 + $0x48] sm:$0xff]
    %v856 = vld [vmem:[%s1 + $0x50] sm:$0xff]
    %v857 = vld [vmem:[%s1 + $0x58] sm:$0xff]
    %v858 = vld [vmem:[%s1 + $0x60] sm:$0xff]
    %v859 = vld [vmem:[%s1 + $0x68] sm:$0xff]
    %v860 = vld [vmem:[%s1 + $0x70] sm:$0xff]
    %v861 = vld [vmem:[%s1 + $0x78] sm:$0xff]
    %v862 = vld [vmem:[%s1 + $0x80] sm:$0xff]
    %v863 = vld [vmem:[%s1 + $0x88] sm:$0xff]
    %v864 = vld [vmem:[%s1 + $0x90] sm:$0xff]
    %v865 = vld [vmem:[%s1 + $0x98] sm:$0xff]
    %v866 = vld [vmem:[%s1 + $0xa0] sm:$0xff]
    %v867 = vld [vmem:[%s1 + $0xa8] sm:$0xff]
    %v868 = vld [vmem:[%s1 + $0xb0] sm:$0xff]
    %v869 = vld [vmem:[%s1 + $0xb8] sm:$0xff]
    %v870 = vld [vmem:[%s1 + $0xc0] sm:$0xff]
    %v871 = vld [vmem:[%s1 + $0xc8] sm:$0xff]
    %v872 = vld [vmem:[%s1 + $0xd0] sm:$0xff]
    %v873 = vld [vmem:[%s1 + $0xd8] sm:$0xff]
    %v874 = vld [vmem:[%s1 + $0xe0] sm:$0xff]
    %v875 = vld [vmem:[%s1 + $0xe8] sm:$0xff]
    %v876 = vld [vmem:[%s1 + $0xf0] sm:$0xff]
    %v877 = vld [vmem:[%s1 + $0xf8] sm:$0xff]
    %v878 = vld [vmem:[%s2] sm:$0xff]
    %v879 = vld [vmem:[%s2 + $0x8] sm:$0xff]
    %v880 = vld [vmem:[%s2 + $0x10] sm:$0xff]
    %v881 = vld [vmem:[%s2 + $0x18] sm:$0xff]
    %v882 = vld [vmem:[%s2 + $0x20] sm:$0xff]
    %v883 = vld [vmem:[%s2 + $0x28] sm:$0xff]
    %v884 = vld [vmem:[%s2 + $0x30] sm:$0xff]
    %v885 = vld [vmem:[%s2 + $0x38] sm:$0xff]
    %v886 = vld [vmem:[%s2 + $0x40] sm:$0xff]
    %v887 = vld [vmem:[%s2 + $0x48] sm:$0xff]
    %v888 = vld [vmem:[%s2 + $0x50] sm:$0xff]
    %v889 = vld [vmem:[%s2 + $0x58] sm:$0xff]
    %v890 = vld [vmem:[%s2 + $0x60] sm:$0xff]
    %v891 = vld [vmem:[%s2 + $0x68] sm:$0xff]
    %v892 = vld [vmem:[%s2 + $0x70] sm:$0xff]
    %v893 = vld [vmem:[%s2 + $0x78] sm:$0xff]
    %895 = vset.pattern.permute.xlu0 0
    %896 = vperm.xlu0 %895, %v878
    %v897 = vpop.permute.xlu0 %896
    %900 = vset.pattern.permute.xlu0 0
    %901 = vperm.xlu0 %900, %v879
    %v902 = vpop.permute.xlu0 %901
    %905 = vset.pattern.permute.xlu0 0
    %906 = vperm.xlu0 %905, %v880
    %v907 = vpop.permute.xlu0 %906
    %910 = vset.pattern.permute.xlu0 0
    %911 = vperm.xlu0 %910, %v881
    %v912 = vpop.permute.xlu0 %911
    %915 = vset.pattern.permute.xlu0 0
    %916 = vperm.xlu0 %915, %v882
    %v917 = vpop.permute.xlu0 %916
    %920 = vset.pattern.permute.xlu0 0
    %921 = vperm.xlu0 %920, %v883
    %v922 = vpop.permute.xlu0 %921
    %925 = vset.pattern.permute.xlu0 0
    %926 = vperm.xlu0 %925, %v884
    %v927 = vpop.permute.xlu0 %926
    %930 = vset.pattern.permute.xlu0 0
    %931 = vperm.xlu0 %930, %v885
    %v932 = vpop.permute.xlu0 %931
    %935 = vset.pattern.permute.xlu0 0
    %936 = vperm.xlu0 %935, %v886
    %v937 = vpop.permute.xlu0 %936
    %940 = vset.pattern.permute.xlu0 0
    %941 = vperm.xlu0 %940, %v887
    %v942 = vpop.permute.xlu0 %941
    %945 = vset.pattern.permute.xlu0 0
    %946 = vperm.xlu0 %945, %v888
    %v947 = vpop.permute.xlu0 %946
    %950 = vset.pattern.permute.xlu0 0
    %951 = vperm.xlu0 %950, %v889
    %v952 = vpop.permute.xlu0 %951
    %955 = vset.pattern.permute.xlu0 0
    %956 = vperm.xlu0 %955, %v890
    %v957 = vpop.permute.xlu0 %956
    %960 = vset.pattern.permute.xlu0 0
    %961 = vperm.xlu0 %960, %v891
    %v962 = vpop.permute.xlu0 %961
    %965 = vset.pattern.permute.xlu0 0
    %966 = vperm.xlu0 %965, %v892
    %v967 = vpop.permute.xlu0 %966
    %970 = vset.pattern.permute.xlu0 0
    %971 = vperm.xlu0 %970, %v893
    %v972 = vpop.permute.xlu0 %971
    %vm974 = vcmask 457728
    %v976 = vsel %vm974, %v847, 0
    %v979 = vsel %vm974, %v849, 0
    %v982 = vsel %vm974, %v851, 0
    %v985 = vsel %vm974, %v853, 0
    %v988 = vsel %vm974, %v855, 0
    %v991 = vsel %vm974, %v857, 0
    %v994 = vsel %vm974, %v859, 0
    %v997 = vsel %vm974, %v861, 0
    %v1000 = vsel %vm974, %v863, 0
    %v1003 = vsel %vm974, %v865, 0
    %v1006 = vsel %vm974, %v867, 0
    %v1009 = vsel %vm974, %v869, 0
    %v1012 = vsel %vm974, %v871, 0
    %v1015 = vsel %vm974, %v873, 0
    %v1018 = vsel %vm974, %v875, 0
    %v1021 = vsel %vm974, %v877, 0
    %1023 = vmatprep.subr.mxu0 %v831
    %1024 = vmatpush1.msra.mxu0 %v830
    %1025 = vmatprep.subr.mxu0 %v829
    %1026 = vmatpush1.msra.mxu0 %v828
    %1027 = vmatprep.subr.mxu0 %v827
    %1028 = vmatpush1.msra.mxu0 %v826
    %1029 = vmatprep.subr.mxu0 %v825
    %1030 = vmatpush1.msra.mxu0 %v824
    %1031 = vmatprep.subr.mxu0 %v823
    %1032 = vmatpush1.msra.mxu0 %v822
    %1033 = vmatprep.subr.mxu0 %v821
    %1034 = vmatpush1.msra.mxu0 %v820
    %1035 = vmatprep.subr.mxu0 %v819
    %1036 = vmatpush1.msra.mxu0 %v818
    %1037 = vmatprep.subr.mxu0 %v817
    %1038 = vmatpush1.msra.mxu0 %v816
    %1039 = vmatprep.subr.mxu0 %v815
    %1040 = vmatpush1.msra.mxu0 %v814
    %1041 = vmatprep.subr.mxu0 %v813
    %1042 = vmatpush1.msra.mxu0 %v812
    %1043 = vmatprep.subr.mxu0 %v811
    %1044 = vmatpush1.msra.mxu0 %v810
    %1045 = vmatprep.subr.mxu0 %v809
    %1046 = vmatpush1.msra.mxu0 %v808
    %1047 = vmatprep.subr.mxu0 %v807
    %1048 = vmatpush1.msra.mxu0 %v806
    %1049 = vmatprep.subr.mxu0 %v805
    %1050 = vmatpush1.msra.mxu0 %v804
    %1051 = vmatprep.subr.mxu0 %v803
    %1052 = vmatpush1.msra.mxu0 %v802
    %1053 = vmatprep.subr.mxu0 %v801
    %1054 = vmatpush1.msra.mxu0 %v800
    %1055 = vmatprep.subr.mxu0 0.0
    %1056 = vmatpush2.msra.mxu0 0.0
    %1057 = vmatprep.subr.mxu0 0.0
    %1058 = vmatpush2.msra.mxu0 0.0
    %1059 = vmatprep.subr.mxu0 0.0
    %1060 = vmatpush2.msra.mxu0 0.0
    %1061 = vmatprep.subr.mxu0 0.0
    %1062 = vmatpush2.msra.mxu0 0.0
    %1063 = vmatprep.subr.mxu0 0.0
    %1064 = vmatpush2.msra.mxu0 0.0
    %1065 = vmatprep.subr.mxu0 0.0
    %1066 = vmatpush2.msra.mxu0 0.0
    %1067 = vmatprep.subr.mxu0 0.0
    %1068 = vmatpush2.msra.mxu0 0.0
    %1069 = vmatprep.subr.mxu0 0.0
    %1070 = vmatpush2.msra.mxu0 0.0
    %1071 = vmatprep.subr.mxu0 0.0
    %1072 = vmatpush2.msra.mxu0 0.0
    %1073 = vmatprep.subr.mxu0 %v845
    %1074 = vmatpush2.msra.mxu0 %v844
    %1075 = vmatprep.subr.mxu0 %v843
    %1076 = vmatpush2.msra.mxu0 %v842
    %1077 = vmatprep.subr.mxu0 %v841
    %1078 = vmatpush2.msra.mxu0 %v840
    %1079 = vmatprep.subr.mxu0 %v839
    %1080 = vmatpush2.msra.mxu0 %v838
    %1081 = vmatprep.subr.mxu0 %v837
    %1082 = vmatpush2.msra.mxu0 %v836
    %1083 = vmatprep.subr.mxu0 %v835
    %1084 = vmatpush2.msra.mxu0 %v834
    %1085 = vmatprep.subr.mxu0 %v833
    %1086 = vmatpush2.msra.mxu0 %v832
    %1087 = vmatprep.mubr.f32.mxu0 %v976
    %1088 = vmatmul.mubr.f32.gmra.mxu0 %v846
    %v1089 = vpop.f32.mrf.mxu0
    %v1090 = vadd.f32 %v897, %v1089
    %v1091 = vpop.f32.mrf.mxu0
    %v1092 = vadd.f32 %v897, %v1091
    %1093 = vmatprep.mubr.f32.mxu0 %v979
    %1094 = vmatmul.mubr.f32.gmra.mxu0 %v848
    %v1095 = vpop.f32.mrf.mxu0
    %v1096 = vadd.f32 %v902, %v1095
    %v1097 = vpop.f32.mrf.mxu0
    %v1098 = vadd.f32 %v902, %v1097
    %1099 = vmatprep.mubr.f32.mxu0 %v982
    %1100 = vmatmul.mubr.f32.gmra.mxu0 %v850
    %v1101 = vpop.f32.mrf.mxu0
    %v1102 = vadd.f32 %v907, %v1101
    %v1103 = vpop.f32.mrf.mxu0
    %v1104 = vadd.f32 %v907, %v1103
    %1105 = vmatprep.mubr.f32.mxu0 %v985
    %1106 = vmatmul.mubr.f32.gmra.mxu0 %v852
    %v1107 = vpop.f32.mrf.mxu0
    %v1108 = vadd.f32 %v912, %v1107
    %v1109 = vpop.f32.mrf.mxu0
    %v1110 = vadd.f32 %v912, %v1109
    %1111 = vmatprep.mubr.f32.mxu0 %v988
    %1112 = vmatmul.mubr.f32.gmra.mxu0 %v854
    %v1113 = vpop.f32.mrf.mxu0
    %v1114 = vadd.f32 %v917, %v1113
    %v1115 = vpop.f32.mrf.mxu0
    %v1116 = vadd.f32 %v917, %v1115
    %1117 = vmatprep.mubr.f32.mxu0 %v991
    %1118 = vmatmul.mubr.f32.gmra.mxu0 %v856
    %v1119 = vpop.f32.mrf.mxu0
    %v1120 = vadd.f32 %v922, %v1119
    %v1121 = vpop.f32.mrf.mxu0
    %v1122 = vadd.f32 %v922, %v1121
    %1123 = vmatprep.mubr.f32.mxu0 %v994
    %1124 = vmatmul.mubr.f32.gmra.mxu0 %v858
    %v1125 = vpop.f32.mrf.mxu0
    %v1126 = vadd.f32 %v927, %v1125
    %v1127 = vpop.f32.mrf.mxu0
    %v1128 = vadd.f32 %v927, %v1127
    %1129 = vmatprep.mubr.f32.mxu0 %v997
    %1130 = vmatmul.mubr.f32.gmra.mxu0 %v860
    %v1131 = vpop.f32.mrf.mxu0
    %v1132 = vadd.f32 %v932, %v1131
    %v1133 = vpop.f32.mrf.mxu0
    %v1134 = vadd.f32 %v932, %v1133
    %1135 = vmatprep.mubr.f32.mxu0 %v1000
    %1136 = vmatmul.mubr.f32.gmra.mxu0 %v862
    %v1137 = vpop.f32.mrf.mxu0
    %v1138 = vadd.f32 %v937, %v1137
    %v1139 = vpop.f32.mrf.mxu0
    %v1140 = vadd.f32 %v937, %v1139
    %1141 = vmatprep.mubr.f32.mxu0 %v1003
    %1142 = vmatmul.mubr.f32.gmra.mxu0 %v864
    %v1143 = vpop.f32.mrf.mxu0
    %v1144 = vadd.f32 %v942, %v1143
    %v1145 = vpop.f32.mrf.mxu0
    %v1146 = vadd.f32 %v942, %v1145
    %1147 = vmatprep.mubr.f32.mxu0 %v1006
    %1148 = vmatmul.mubr.f32.gmra.mxu0 %v866
    %v1149 = vpop.f32.mrf.mxu0
    %v1150 = vadd.f32 %v947, %v1149
    %v1151 = vpop.f32.mrf.mxu0
    %v1152 = vadd.f32 %v947, %v1151
    %1153 = vmatprep.mubr.f32.mxu0 %v1009
    %1154 = vmatmul.mubr.f32.gmra.mxu0 %v868
    %v1155 = vpop.f32.mrf.mxu0
    %v1156 = vadd.f32 %v952, %v1155
    %v1157 = vpop.f32.mrf.mxu0
    %v1158 = vadd.f32 %v952, %v1157
    %1159 = vmatprep.mubr.f32.mxu0 %v1012
    %1160 = vmatmul.mubr.f32.gmra.mxu0 %v870
    %v1161 = vpop.f32.mrf.mxu0
    %v1162 = vadd.f32 %v957, %v1161
    %v1163 = vpop.f32.mrf.mxu0
    %v1164 = vadd.f32 %v957, %v1163
    %1165 = vmatprep.mubr.f32.mxu0 %v1015
    %1166 = vmatmul.mubr.f32.gmra.mxu0 %v872
    %v1167 = vpop.f32.mrf.mxu0
    %v1168 = vadd.f32 %v962, %v1167
    %v1169 = vpop.f32.mrf.mxu0
    %v1170 = vadd.f32 %v962, %v1169
    %1171 = vmatprep.mubr.f32.mxu0 %v1018
    %1172 = vmatmul.mubr.f32.gmra.mxu0 %v874
    %v1173 = vpop.f32.mrf.mxu0
    %v1174 = vadd.f32 %v967, %v1173
    %v1175 = vpop.f32.mrf.mxu0
    %v1176 = vadd.f32 %v967, %v1175
    %1177 = vmatprep.mubr.f32.mxu0 %v1021
    %1178 = vmatmul.mubr.f32.gmra.mxu0 %v876
    %v1179 = vpop.f32.mrf.mxu0
    %v1180 = vadd.f32 %v972, %v1179
    %v1181 = vpop.f32.mrf.mxu0
    %v1182 = vadd.f32 %v972, %v1181
    %1183 = vdwg.mxu0
    %v1184 = vmax.f32 %v1090, 0.0
    %v1185 = vmax.f32 %v1092, 0.0
    %v1186 = vmax.f32 %v1096, 0.0
    %v1187 = vmax.f32 %v1098, 0.0
    %v1188 = vmax.f32 %v1102, 0.0
    %v1189 = vmax.f32 %v1104, 0.0
    %v1190 = vmax.f32 %v1108, 0.0
    %v1191 = vmax.f32 %v1110, 0.0
    %v1192 = vmax.f32 %v1114, 0.0
    %v1193 = vmax.f32 %v1116, 0.0
    %v1194 = vmax.f32 %v1120, 0.0
    %v1195 = vmax.f32 %v1122, 0.0
    %v1196 = vmax.f32 %v1126, 0.0
    %v1197 = vmax.f32 %v1128, 0.0
    %v1198 = vmax.f32 %v1132, 0.0
    %v1199 = vmax.f32 %v1134, 0.0
    %v1200 = vmax.f32 %v1138, 0.0
    %v1201 = vmax.f32 %v1140, 0.0
    %v1202 = vmax.f32 %v1144, 0.0
    %v1203 = vmax.f32 %v1146, 0.0
    %v1204 = vmax.f32 %v1150, 0.0
    %v1205 = vmax.f32 %v1152, 0.0
    %v1206 = vmax.f32 %v1156, 0.0
    %v1207 = vmax.f32 %v1158, 0.0
    %v1208 = vmax.f32 %v1162, 0.0
    %v1209 = vmax.f32 %v1164, 0.0
    %v1210 = vmax.f32 %v1168, 0.0
    %v1211 = vmax.f32 %v1170, 0.0
    %v1212 = vmax.f32 %v1174, 0.0
    %v1213 = vmax.f32 %v1176, 0.0
    %v1214 = vmax.f32 %v1180, 0.0
    %v1215 = vmax.f32 %v1182, 0.0
    %v1216 = vld [vmem:[%s3] sm:$0xff]
    %v1217 = vld [vmem:[%s3 + $0x8] sm:$0xff]
    %v1218 = vld [vmem:[%s3 + $0x10] sm:$0xff]
    %v1219 = vld [vmem:[%s3 + $0x18] sm:$0xff]
    %v1220 = vld [vmem:[%s3 + $0x20] sm:$0xff]
    %v1221 = vld [vmem:[%s3 + $0x28] sm:$0xff]
    %v1222 = vld [vmem:[%s3 + $0x30] sm:$0xff]
    %v1223 = vld [vmem:[%s3 + $0x38] sm:$0xff]
    %v1224 = vld [vmem:[%s4] sm:$0xff]
    %v1225 = vld [vmem:[%s4 + $0x8] sm:$0xff]
    %v1226 = vld [vmem:[%s4 + $0x10] sm:$0xff]
    %v1227 = vld [vmem:[%s4 + $0x18] sm:$0xff]
    %v1228 = vld [vmem:[%s4 + $0x20] sm:$0xff]
    %v1229 = vld [vmem:[%s4 + $0x28] sm:$0xff]
    %v1230 = vld [vmem:[%s4 + $0x30] sm:$0xff]
    %v1231 = vld [vmem:[%s4 + $0x38] sm:$0xff]
    %1233 = vset.pattern.permute.xlu0 0
    %1234 = vperm.xlu0 %1233, %v1224
    %v1235 = vpop.permute.xlu0 %1234
    %1238 = vset.pattern.permute.xlu0 0
    %1239 = vperm.xlu0 %1238, %v1225
    %v1240 = vpop.permute.xlu0 %1239
    %1243 = vset.pattern.permute.xlu0 0
    %1244 = vperm.xlu0 %1243, %v1226
    %v1245 = vpop.permute.xlu0 %1244
    %1248 = vset.pattern.permute.xlu0 0
    %1249 = vperm.xlu0 %1248, %v1227
    %v1250 = vpop.permute.xlu0 %1249
    %1253 = vset.pattern.permute.xlu0 0
    %1254 = vperm.xlu0 %1253, %v1228
    %v1255 = vpop.permute.xlu0 %1254
    %1258 = vset.pattern.permute.xlu0 0
    %1259 = vperm.xlu0 %1258, %v1229
    %v1260 = vpop.permute.xlu0 %1259
    %1263 = vset.pattern.permute.xlu0 0
    %1264 = vperm.xlu0 %1263, %v1230
    %v1265 = vpop.permute.xlu0 %1264
    %1268 = vset.pattern.permute.xlu0 0
    %1269 = vperm.xlu0 %1268, %v1231
    %v1270 = vpop.permute.xlu0 %1269
    %1272 = vmatprep.subr.mxu0 %v1215
    %1273 = vmatpush1.msra.mxu0 %v1214
    %1274 = vmatprep.subr.mxu0 %v1213
    %1275 = vmatpush1.msra.mxu0 %v1212
    %1276 = vmatprep.subr.mxu0 %v1211
    %1277 = vmatpush1.msra.mxu0 %v1210
    %1278 = vmatprep.subr.mxu0 %v1209
    %1279 = vmatpush1.msra.mxu0 %v1208
    %1280 = vmatprep.subr.mxu0 %v1207
    %1281 = vmatpush1.msra.mxu0 %v1206
    %1282 = vmatprep.subr.mxu0 %v1205
    %1283 = vmatpush1.msra.mxu0 %v1204
    %1284 = vmatprep.subr.mxu0 %v1203
    %1285 = vmatpush1.msra.mxu0 %v1202
    %1286 = vmatprep.subr.mxu0 %v1201
    %1287 = vmatpush1.msra.mxu0 %v1200
    %1288 = vmatprep.subr.mxu0 %v1199
    %1289 = vmatpush1.msra.mxu0 %v1198
    %1290 = vmatprep.subr.mxu0 %v1197
    %1291 = vmatpush1.msra.mxu0 %v1196
    %1292 = vmatprep.subr.mxu0 %v1195
    %1293 = vmatpush1.msra.mxu0 %v1194
    %1294 = vmatprep.subr.mxu0 %v1193
    %1295 = vmatpush1.msra.mxu0 %v1192
    %1296 = vmatprep.subr.mxu0 %v1191
    %1297 = vmatpush1.msra.mxu0 %v1190
    %1298 = vmatprep.subr.mxu0 %v1189
    %1299 = vmatpush1.msra.mxu0 %v1188
    %1300 = vmatprep.subr.mxu0 %v1187
    %1301 = vmatpush1.msra.mxu0 %v1186
    %1302 = vmatprep.subr.mxu0 %v1185
    %1303 = vmatpush1.msra.mxu0 %v1184
    %1304 = vmatprep.subr.mxu0 0.0
    %1305 = vmatpush2.msra.mxu0 0.0
    %1306 = vmatprep.subr.mxu0 0.0
    %1307 = vmatpush2.msra.mxu0 0.0
    %1308 = vmatprep.subr.mxu0 0.0
    %1309 = vmatpush2.msra.mxu0 0.0
    %1310 = vmatprep.subr.mxu0 0.0
    %1311 = vmatpush2.msra.mxu0 0.0
    %1312 = vmatprep.subr.mxu0 0.0
    %1313 = vmatpush2.msra.mxu0 0.0
    %1314 = vmatprep.subr.mxu0 0.0
    %1315 = vmatpush2.msra.mxu0 0.0
    %1316 = vmatprep.subr.mxu0 0.0
    %1317 = vmatpush2.msra.mxu0 0.0
    %1318 = vmatprep.subr.mxu0 0.0
    %1319 = vmatpush2.msra.mxu0 0.0
    %1320 = vmatprep.subr.mxu0 0.0
    %1321 = vmatpush2.msra.mxu0 0.0
    %1322 = vmatprep.subr.mxu0 0.0
    %1323 = vmatpush2.msra.mxu0 0.0
    %1324 = vmatprep.subr.mxu0 0.0
    %1325 = vmatpush2.msra.mxu0 0.0
    %1326 = vmatprep.subr.mxu0 0.0
    %1327 = vmatpush2.msra.mxu0 0.0
    %1328 = vmatprep.subr.mxu0 0.0
    %1329 = vmatpush2.msra.mxu0 0.0
    %1330 = vmatprep.subr.mxu0 0.0
    %1331 = vmatpush2.msra.mxu0 0.0
    %1332 = vmatprep.subr.mxu0 0.0
    %1333 = vmatpush2.msra.mxu0 0.0
    %1334 = vmatprep.subr.mxu0 0.0
    %1335 = vmatpush2.msra.mxu0 0.0
    %1336 = vmatprep.mubr.f32.mxu0 0.0
    %1337 = vmatmul.mubr.f32.gmra.mxu0 %v1216
    %v1338 = vpop.f32.mrf.mxu0
    %v1339 = vadd.f32 %v1235, %v1338
    %v1340 = vpop.f32.mrf.mxu0
    %v1341 = vadd.f32 %v1235, %v1340
    %1342 = vmatprep.mubr.f32.mxu0 0.0
    %1343 = vmatmul.mubr.f32.gmra.mxu0 %v1217
    %v1344 = vpop.f32.mrf.mxu0
    %v1345 = vadd.f32 %v1240, %v1344
    %v1346 = vpop.f32.mrf.mxu0
    %v1347 = vadd.f32 %v1240, %v1346
    %1348 = vmatprep.mubr.f32.mxu0 0.0
    %1349 = vmatmul.mubr.f32.gmra.mxu0 %v1218
    %v1350 = vpop.f32.mrf.mxu0
    %v1351 = vadd.f32 %v1245, %v1350
    %v1352 = vpop.f32.mrf.mxu0
    %v1353 = vadd.f32 %v1245, %v1352
    %1354 = vmatprep.mubr.f32.mxu0 0.0
    %1355 = vmatmul.mubr.f32.gmra.mxu0 %v1219
    %v1356 = vpop.f32.mrf.mxu0
    %v1357 = vadd.f32 %v1250, %v1356
    %v1358 = vpop.f32.mrf.mxu0
    %v1359 = vadd.f32 %v1250, %v1358
    %1360 = vmatprep.mubr.f32.mxu0 0.0
    %1361 = vmatmul.mubr.f32.gmra.mxu0 %v1220
    %v1362 = vpop.f32.mrf.mxu0
    %v1363 = vadd.f32 %v1255, %v1362
    %v1364 = vpop.f32.mrf.mxu0
    %v1365 = vadd.f32 %v1255, %v1364
    %1366 = vmatprep.mubr.f32.mxu0 0.0
    %1367 = vmatmul.mubr.f32.gmra.mxu0 %v1221
    %v1368 = vpop.f32.mrf.mxu0
    %v1369 = vadd.f32 %v1260, %v1368
    %v1370 = vpop.f32.mrf.mxu0
    %v1371 = vadd.f32 %v1260, %v1370
    %1372 = vmatprep.mubr.f32.mxu0 0.0
    %1373 = vmatmul.mubr.f32.gmra.mxu0 %v1222
    %v1374 = vpop.f32.mrf.mxu0
    %v1375 = vadd.f32 %v1265, %v1374
    %v1376 = vpop.f32.mrf.mxu0
    %v1377 = vadd.f32 %v1265, %v1376
    %1378 = vmatprep.mubr.f32.mxu0 0.0
    %1379 = vmatmul.mubr.f32.gmra.mxu0 %v1223
    %v1380 = vpop.f32.mrf.mxu0
    %v1381 = vadd.f32 %v1270, %v1380
    %v1382 = vpop.f32.mrf.mxu0
    %v1383 = vadd.f32 %v1270, %v1382
    %1384 = vdwg.mxu0
    %v1385 = vmax.f32 %v1339, 0.0
    %v1386 = vmax.f32 %v1341, 0.0
    %v1387 = vmax.f32 %v1345, 0.0
    %v1388 = vmax.f32 %v1347, 0.0
    %v1389 = vmax.f32 %v1351, 0.0
    %v1390 = vmax.f32 %v1353, 0.0
    %v1391 = vmax.f32 %v1357, 0.0
    %v1392 = vmax.f32 %v1359, 0.0
    %v1393 = vmax.f32 %v1363, 0.0
    %v1394 = vmax.f32 %v1365, 0.0
    %v1395 = vmax.f32 %v1369, 0.0
    %v1396 = vmax.f32 %v1371, 0.0
    %v1397 = vmax.f32 %v1375, 0.0
    %v1398 = vmax.f32 %v1377, 0.0
    %v1399 = vmax.f32 %v1381, 0.0
    %v1400 = vmax.f32 %v1383, 0.0
    %v1401 = vmul.f32 %v1385, %v1385
    %v1402 = vmul.f32 %v1386, %v1386
    %v1403 = vmul.f32 %v1387, %v1387
    %v1404 = vmul.f32 %v1388, %v1388
    %v1405 = vmul.f32 %v1389, %v1389
    %v1406 = vmul.f32 %v1390, %v1390
    %v1407 = vmul.f32 %v1391, %v1391
    %v1408 = vmul.f32 %v1392, %v1392
    %v1409 = vadd.f32 %v1401, %v1403
    %v1410 = vadd.f32 %v1409, %v1405
    %v1411 = vadd.f32 %v1410, %v1407
    %v1412 = vrot.slane %v1411, 4
    %v1413 = vadd.f32 %v1411, %v1412
    %v1414 = vrot.slane %v1413, 2
    %v1415 = vadd.f32 %v1413, %v1414
    %v1416 = vrot.slane %v1415, 1
    %v1417 = vadd.f32 %v1415, %v1416
    %v1418 = vadd.f32 %v1402, %v1404
    %v1419 = vadd.f32 %v1418, %v1406
    %v1420 = vadd.f32 %v1419, %v1408
    %v1421 = vrot.slane %v1420, 4
    %v1422 = vadd.f32 %v1420, %v1421
    %v1423 = vrot.slane %v1422, 2
    %v1424 = vadd.f32 %v1422, %v1423
    %v1425 = vrot.slane %v1424, 1
    %v1426 = vadd.f32 %v1424, %v1425
    %v1427 = vrsqrt.pop %v1417
    %v1428 = vmul.f32 %v1417, %v1427
    %vm1429 = vcmp.eq.f32.partialorder %v1417, inf
    %v1430 = vsel %vm1429, %v1417, %v1428
    %vm1431 = vcmp.eq.f32.partialorder %v1417, 0.0
    %v1432 = vand.u32 %v1417, 2147483648
    %v1433 = vsel %vm1431, %v1432, %v1430
    %v1434 = vrsqrt.pop %v1426
    %v1435 = vmul.f32 %v1426, %v1434
    %vm1436 = vcmp.eq.f32.partialorder %v1426, inf
    %v1437 = vsel %vm1436, %v1426, %v1435
    %vm1438 = vcmp.eq.f32.partialorder %v1426, 0.0
    %v1439 = vand.u32 %v1426, 2147483648
    %v1440 = vsel %vm1438, %v1439, %v1437
    %v1441 = vmax.f32 %v1433, 1e-12
    %v1442 = vmax.f32 %v1440, 1e-12
    %v1443 = vrcp.pop %v1441
    %v1444 = vrcp.pop %v1442
    %v1445 = vmul.f32 %v1393, %v1393
    %v1446 = vmul.f32 %v1394, %v1394
    %v1447 = vmul.f32 %v1395, %v1395
    %v1448 = vmul.f32 %v1396, %v1396
    %v1449 = vmul.f32 %v1397, %v1397
    %v1450 = vmul.f32 %v1398, %v1398
    %v1451 = vmul.f32 %v1399, %v1399
    %v1452 = vmul.f32 %v1400, %v1400
    %v1453 = vadd.f32 %v1445, %v1447
    %v1454 = vadd.f32 %v1453, %v1449
    %v1455 = vadd.f32 %v1454, %v1451
    %v1456 = vrot.slane %v1455, 4
    %v1457 = vadd.f32 %v1455, %v1456
    %v1458 = vrot.slane %v1457, 2
    %v1459 = vadd.f32 %v1457, %v1458
    %v1460 = vrot.slane %v1459, 1
    %v1461 = vadd.f32 %v1459, %v1460
    %v1462 = vadd.f32 %v1446, %v1448
    %v1463 = vadd.f32 %v1462, %v1450
    %v1464 = vadd.f32 %v1463, %v1452
    %v1465 = vrot.slane %v1464, 4
    %v1466 = vadd.f32 %v1464, %v1465
    %v1467 = vrot.slane %v1466, 2
    %v1468 = vadd.f32 %v1466, %v1467
    %v1469 = vrot.slane %v1468, 1
    %v1470 = vadd.f32 %v1468, %v1469
    %v1471 = vrsqrt.pop %v1461
    %v1472 = vmul.f32 %v1461, %v1471
    %vm1473 = vcmp.eq.f32.partialorder %v1461, inf
    %v1474 = vsel %vm1473, %v1461, %v1472
    %vm1475 = vcmp.eq.f32.partialorder %v1461, 0.0
    %v1476 = vand.u32 %v1461, 2147483648
    %v1477 = vsel %vm1475, %v1476, %v1474
    %v1478 = vrsqrt.pop %v1470
    %v1479 = vmul.f32 %v1470, %v1478
    %vm1480 = vcmp.eq.f32.partialorder %v1470, inf
    %v1481 = vsel %vm1480, %v1470, %v1479
    %vm1482 = vcmp.eq.f32.partialorder %v1470, 0.0
    %v1483 = vand.u32 %v1470, 2147483648
    %v1484 = vsel %vm1482, %v1483, %v1481
    %v1485 = vmax.f32 %v1477, 1e-12
    %v1486 = vmax.f32 %v1484, 1e-12
    %v1487 = vrcp.pop %v1485
    %v1488 = vrcp.pop %v1486
    %v1489 = vmul.f32 %v1385, %v1393
    %v1490 = vmul.f32 %v1386, %v1394
    %v1491 = vmul.f32 %v1387, %v1395
    %v1492 = vmul.f32 %v1388, %v1396
    %v1493 = vmul.f32 %v1389, %v1397
    %v1494 = vmul.f32 %v1390, %v1398
    %v1495 = vmul.f32 %v1391, %v1399
    %v1496 = vmul.f32 %v1392, %v1400
    %v1497 = vadd.f32 %v1489, %v1491
    %v1498 = vadd.f32 %v1497, %v1493
    %v1499 = vadd.f32 %v1498, %v1495
    %v1500 = vrot.slane %v1499, 4
    %v1501 = vadd.f32 %v1499, %v1500
    %v1502 = vrot.slane %v1501, 2
    %v1503 = vadd.f32 %v1501, %v1502
    %v1504 = vrot.slane %v1503, 1
    %v1505 = vadd.f32 %v1503, %v1504
    %v1506 = vadd.f32 %v1490, %v1492
    %v1507 = vadd.f32 %v1506, %v1494
    %v1508 = vadd.f32 %v1507, %v1496
    %v1509 = vrot.slane %v1508, 4
    %v1510 = vadd.f32 %v1508, %v1509
    %v1511 = vrot.slane %v1510, 2
    %v1512 = vadd.f32 %v1510, %v1511
    %v1513 = vrot.slane %v1512, 1
    %v1514 = vadd.f32 %v1512, %v1513
    %v1515 = vmul.f32 %v1443, %v1487
    %v1516 = vmul.f32 %v1444, %v1488
    %v1517 = vmul.f32 %v1505, %v1515
    %v1518 = vmul.f32 %v1514, %v1516
    %v1519 = vsub.f32 0.0, %v1517
    %v1520 = vsub.f32 0.0, %v1518
    %v1521 = vmul.f32 %v1519, 1.442695
    %v1522 = vpow.pop %v1521
    %v1523 = vmul.f32 %v1520, 1.442695
    %v1524 = vpow.pop %v1523
    %v1525 = vadd.f32 %v1522, 1.0
    %v1526 = vadd.f32 %v1524, 1.0
    %v1527 = vrcp.pop %v1525
    %v1528 = vrcp.pop %v1526
    %v1531 = vcombine.low %v1527, %v1528
    %v1533 = vunpack.c.l.s4 1966171168
    %v1534 = vunpack.c.0.s8 %v1533
    %v1535 = vlaneseq
    %v1536 = vshrl.u32 %v1535, 7
    %v1537 = vsub.s32 %v1534, %v1536
    %v1538 = vrot.slane %v1531, %v1537
    %v1540 = vunpack.c.l.s4 1966171168
    %v1541 = vunpack.c.0.s8 %v1540
    %v1542 = vlaneseq
    %v1543 = vshrl.u32 %v1542, 7
    %v1544 = vsub.s32 %v1541, %v1543
    %v1545 = vrot.slane %v1538, %v1544
    %v1547 = vlaneseq
    %vm1548 = vcmp.ge.s32.totalorder %v1547, 0
    %vm1549 = vcmp.lt.s32.totalorder %v1547, 256
    %vm1550 = vmand %vm1548, %vm1549
    %1551 = vst.msk [vmem:[#allocation2] sm:$0x3] %vm1550, %v1545
    // Predicated region
    $region22: #{tpu_custom_call.1} parent=1 // pred_check
      _
    $region23: #{tpu_custom_call.1} parent=1 // pred_check_branch
      %1553 = sbr.rel (0) target = $region25
    $region24: #{tpu_custom_call.1} parent=1 // pred_region
      %s1555 = ssub.s32 32, 32
      %1556 = vsyncadd [#allocation3], %s1555
      %s1558 = sshll.u32 [#allocation2], 4
      %s1559 = int_to_ptr.vmem [resolvable:$true] %s1558
      %1561 = dma.vmem_to_hbm [thread:$0]  %s1559, 32, %s5, [#allocation3]
    $region25: #{tpu_custom_call.1} parent=1 // pred_fallthru
      _
    // Predicated region
    $region26: #{tpu_custom_call.1} parent=1 // pred_check
      _
    $region27: #{tpu_custom_call.1} parent=1 // pred_check_branch
      %1563 = sbr.rel (0) target = $region29
    $region28: #{tpu_custom_call.1} parent=1 // pred_region
      %1564 = dma.done [#allocation3], 32
    $region29: #{tpu_custom_call.1} parent=1 // pred_fallthru
      _
    %1565 = vsyncpa [#allocation3], 1

</llo_original>
